<compile_context>
chip_gen: v7x
topology: tpu7x:2x2x1
jax: 0.10.0
libtpu: 0.0.40
codegen_flags: <defaults>
</compile_context>

<pallas_src>
import functools

import jax
import jax.numpy as jnp
from jax.experimental import pallas as pl
from jax.experimental.pallas import tpu as pltpu


def _round_up(x, m):
    return (x + m - 1) // m * m


# ---------------------------------------------------------------------------
# Bilinear x2 upsample, align_corners=True, NCHW (JAX glue; gather-based)
# ---------------------------------------------------------------------------
def upsample2x_bilinear_ac(x):  # (N, C, H, W)
    N, C, H, W = x.shape
    Ho, Wo = 2 * H, 2 * W
    hs = jnp.linspace(0.0, H - 1.0, Ho)
    ws = jnp.linspace(0.0, W - 1.0, Wo)
    h0 = jnp.floor(hs).astype(jnp.int32)
    h1 = jnp.minimum(h0 + 1, H - 1)
    fh = (hs - h0.astype(hs.dtype))[None, None, :, None]
    w0 = jnp.floor(ws).astype(jnp.int32)
    w1 = jnp.minimum(w0 + 1, W - 1)
    fw = (ws - w0.astype(ws.dtype))[None, None, None, :]
    xr = x[:, :, h0, :] * (1.0 - fh) + x[:, :, h1, :] * fh
    return xr[:, :, :, w0] * (1.0 - fw) + xr[:, :, :, w1] * fw


# ---------------------------------------------------------------------------
# Host-side helpers: conv boundary masks + weight packing for the im2col layout
# ---------------------------------------------------------------------------
def _conv3x3_masks(H, W):
    """(9, H*W) f32 validity masks, one per 3x3 tap, for zero-padding."""
    hh = jnp.arange(H).reshape(H, 1)
    ww = jnp.arange(W).reshape(1, W)
    ms = []
    for kh in range(3):
        for kw in range(3):
            valid = ((hh + kh - 1 >= 0) & (hh + kh - 1 < H) &
                     (ww + kw - 1 >= 0) & (ww + kw - 1 < W))
            ms.append(valid.reshape(1, H * W))
    return jnp.concatenate(ms, axis=0).astype(jnp.float32)


def _pack_w3x3(w_hwio, c_pad):
    """(3,3,C,OC) HWIO -> (OC, 9*c_pad) bf16 matching the im2col row layout
    (tap-major, channel-minor, channels zero-padded to c_pad)."""
    _, _, C, OC = w_hwio.shape
    w = jnp.transpose(w_hwio, (3, 0, 1, 2))                   # (OC, 3, 3, C)
    w = jnp.pad(w, ((0, 0), (0, 0), (0, 0), (0, c_pad - C)))
    return w.reshape(OC, 9 * c_pad).astype(jnp.bfloat16)


# ---------------------------------------------------------------------------
# In-kernel helper: given a channel-padded block y (c_pad, P), write the 9
# shifted copies into the im2col scratch at rows [base + k*c_pad, ...).
# All stores are sublane-aligned (c_pad is a multiple of 8).  Shifts use
# pltpu.roll on the flattened lane axis + precomputed boundary masks.
# ---------------------------------------------------------------------------
def _im2col_store(patch_ref, y, masks, W, c_pad, base):
    P = y.shape[1]
    k = 0
    for kh in range(3):
        for kw in range(3):
            off = (kh - 1) * W + (kw - 1)          # flat source offset
            sh = pltpu.roll(y, shift=(-off) % P, axis=1) if off != 0 else y
            patch_ref[base + k * c_pad:base + (k + 1) * c_pad, :] = (
                sh * masks[k:k + 1, :])
            k += 1


# ---------------------------------------------------------------------------
# Kernel 1: per-channel sum / sum^2 of cat = [up, skip]  (BN1 batch statistics)
# Accumulated in resident output blocks (constant block index).
# ---------------------------------------------------------------------------
def _cat_stats_kernel(up_ref, sk_ref, usum_ref, usq_ref, ssum_ref, ssq_ref):
    @pl.when(pl.program_id(0) == 0)
    def _():
        usum_ref[...] = jnp.zeros_like(usum_ref)
        usq_ref[...] = jnp.zeros_like(usq_ref)
        ssum_ref[...] = jnp.zeros_like(ssum_ref)
        ssq_ref[...] = jnp.zeros_like(ssq_ref)

    u = up_ref[0]                                  # (Cin, P)
    s = sk_ref[0]                                  # (Csk, P)
    usum_ref[...] += jnp.sum(u, axis=1, keepdims=True)
    usq_ref[...] += jnp.sum(u * u, axis=1, keepdims=True)
    ssum_ref[...] += jnp.sum(s, axis=1, keepdims=True)
    ssq_ref[...] += jnp.sum(s * s, axis=1, keepdims=True)


# ---------------------------------------------------------------------------
# Kernel 2: BN1+ReLU (fused) -> conv3x3 as ONE bf16 im2col matmul -> x1,
#           plus x1 per-channel sum / sum^2 accumulated in the epilogue.
# ---------------------------------------------------------------------------
def _bn_conv3x3_stats_kernel(W, c_pad, up_ref, sk_ref, scu_ref, biu_ref,
                             scs_ref, bis_ref, w_ref, b_ref, mask_ref,
                             x1_ref, s1_ref, s2_ref, patch_ref):
    @pl.when(pl.program_id(0) == 0)
    def _():
        s1_ref[...] = jnp.zeros_like(s1_ref)
        s2_ref[...] = jnp.zeros_like(s2_ref)

    P = up_ref.shape[2]
    cin = up_ref.shape[1]
    csk = sk_ref.shape[1]

    # BN(affine) + ReLU, f32, applied to the two channel groups of `cat`,
    # then zero-padded up to c_pad channels (pad rows must be finite; weight
    # columns for them are zero).
    u = jnp.maximum(up_ref[0] * scu_ref[...] + biu_ref[...], 0.0)
    s = jnp.maximum(sk_ref[0] * scs_ref[...] + bis_ref[...], 0.0)
    parts = [u, s]
    if c_pad - cin - csk:
        parts.append(jnp.zeros((c_pad - cin - csk, P), jnp.float32))
    y = jnp.concatenate(parts, axis=0)                         # (c_pad, P)
    _im2col_store(patch_ref, y, mask_ref[...], W, c_pad, 0)

    patches = patch_ref[...].astype(jnp.bfloat16)              # (9*c_pad, P)
    x1 = jnp.dot(w_ref[...], patches,
                 preferred_element_type=jnp.float32) + b_ref[...]   # (OC, P)
    x1_ref[0] = x1                                             # lane-dense store

    s1_ref[...] += jnp.sum(x1, axis=1, keepdims=True)
    s2_ref[...] += jnp.sum(x1 * x1, axis=1, keepdims=True)


# ---------------------------------------------------------------------------
# Kernel 3: BN2+ReLU (fused) -> conv3x3 + 1x1 shortcut on raw cat, all folded
#           into a SINGLE bf16 matmul (K = 9*c_pad + padded cat channels).
# ---------------------------------------------------------------------------
def _bn_conv3x3_shortcut_kernel(W, c_pad, cat_pad, x1_ref, up_ref, sk_ref,
                                sc_ref, bi_ref, w_ref, b_ref, mask_ref,
                                o_ref, patch_ref):
    P = x1_ref.shape[2]
    oc = x1_ref.shape[1]
    cin = up_ref.shape[1]
    csk = sk_ref.shape[1]

    y2 = jnp.maximum(x1_ref[0] * sc_ref[...] + bi_ref[...], 0.0)   # (OC, P)
    parts = [y2]
    if c_pad - oc:
        parts.append(jnp.zeros((c_pad - oc, P), jnp.float32))
    y = jnp.concatenate(parts, axis=0) if len(parts) > 1 else y2   # (c_pad, P)
    _im2col_store(patch_ref, y, mask_ref[...], W, c_pad, 0)

    base = 9 * c_pad
    cat_parts = [up_ref[0], sk_ref[0]]                             # raw cat
    if cat_pad - cin - csk:
        cat_parts.append(jnp.zeros((cat_pad - cin - csk, P), jnp.float32))
    patch_ref[base:base + cat_pad, :] = jnp.concatenate(cat_parts, axis=0)

    patches = patch_ref[...].astype(jnp.bfloat16)
    out = jnp.dot(w_ref[...], patches,
                  preferred_element_type=jnp.float32) + b_ref[...]  # (OC, P)
    o_ref[0] = out


# ---------------------------------------------------------------------------
# decoder_block forward (NCHW in / NCHW out, like PyTorch)
# ---------------------------------------------------------------------------
def decoder_block_forward(params, inputs_nchw, skip_nchw, eps=1e-5):
    f32 = jnp.float32
    N, Cin, H, W = inputs_nchw.shape
    Csk = skip_nchw.shape[1]
    H2, W2 = 2 * H, 2 * W
    P = H2 * W2
    C = Cin + Csk
    OC = params["w1"].shape[-1]

    up_f = upsample2x_bilinear_ac(inputs_nchw.astype(f32)).reshape(N, Cin, P)
    sk_f = skip_nchw.astype(f32).reshape(N, Csk, P)
    masks = _conv3x3_masks(H2, W2)                 # (9, P) f32 (constant)
    cnt = float(N * P)

    # ---- kernel 1: BN1 batch statistics over cat channels -------------------
    usum, usq, ssum, ssq = pl.pallas_call(
        _cat_stats_kernel,
        out_shape=(jax.ShapeDtypeStruct((Cin, 1), f32),
                   jax.ShapeDtypeStruct((Cin, 1), f32),
                   jax.ShapeDtypeStruct((Csk, 1), f32),
                   jax.ShapeDtypeStruct((Csk, 1), f32)),
        grid=(N,),
        in_specs=[pl.BlockSpec((1, Cin, P), lambda n: (n, 0, 0)),
                  pl.BlockSpec((1, Csk, P), lambda n: (n, 0, 0))],
        out_specs=(pl.BlockSpec((Cin, 1), lambda n: (0, 0)),
                   pl.BlockSpec((Cin, 1), lambda n: (0, 0)),
                   pl.BlockSpec((Csk, 1), lambda n: (0, 0)),
                   pl.BlockSpec((Csk, 1), lambda n: (0, 0))),
        compiler_params=pltpu.CompilerParams(
            dimension_semantics=("arbitrary",)),
    )(up_f, sk_f)

    sum1 = jnp.concatenate([usum, ssum], axis=0)[:, 0]       # (C,)
    sq1 = jnp.concatenate([usq, ssq], axis=0)[:, 0]
    mean1 = sum1 / cnt
    # TODO(synk): single-pass E[x^2]-E[x]^2 variance; a two-pass/Welford variant
    # would be more robust if activation means are large relative to spread.
    var1 = sq1 / cnt - mean1 * mean1
    scale1 = params["g1"] / jnp.sqrt(var1 + eps)
    bias1 = params["be1"] - mean1 * scale1

    # ---- kernel 2: fused BN1+ReLU + conv1(3x3) + x1 stats --------------------
    cp1 = _round_up(C, 8)                                    # per-tap channel pad
    w1f = _pack_w3x3(params["w1"], cp1)                      # (OC, 9*cp1) bf16
    k2 = functools.partial(_bn_conv3x3_stats_kernel, W2, cp1)
    x1_f, s1sum, s1sq = pl.pallas_call(
        k2,
        out_shape=(jax.ShapeDtypeStruct((N, OC, P), f32),
                   jax.ShapeDtypeStruct((OC, 1), f32),
                   jax.ShapeDtypeStruct((OC, 1), f32)),
        grid=(N,),
        in_specs=[
            pl.BlockSpec((1, Cin, P), lambda n: (n, 0, 0)),
            pl.BlockSpec((1, Csk, P), lambda n: (n, 0, 0)),
            pl.BlockSpec((Cin, 1), lambda n: (0, 0)),
            pl.BlockSpec((Cin, 1), lambda n: (0, 0)),
            pl.BlockSpec((Csk, 1), lambda n: (0, 0)),
            pl.BlockSpec((Csk, 1), lambda n: (0, 0)),
            pl.BlockSpec((OC, 9 * cp1), lambda n: (0, 0)),
            pl.BlockSpec((OC, 1), lambda n: (0, 0)),
            pl.BlockSpec((9, P), lambda n: (0, 0)),
        ],
        out_specs=(pl.BlockSpec((1, OC, P), lambda n: (n, 0, 0)),
                   pl.BlockSpec((OC, 1), lambda n: (0, 0)),
                   pl.BlockSpec((OC, 1), lambda n: (0, 0))),
        scratch_shapes=[pltpu.VMEM((9 * cp1, P), f32)],
        compiler_params=pltpu.CompilerParams(
            dimension_semantics=("arbitrary",)),
    )(up_f, sk_f,
      scale1[:Cin].reshape(Cin, 1), bias1[:Cin].reshape(Cin, 1),
      scale1[Cin:].reshape(Csk, 1), bias1[Cin:].reshape(Csk, 1),
      w1f, params["b1"].reshape(OC, 1), masks)

    mean2 = s1sum[:, 0] / cnt
    var2 = s1sq[:, 0] / cnt - mean2 * mean2
    scale2 = params["g2"] / jnp.sqrt(var2 + eps)
    bias2 = params["be2"] - mean2 * scale2

    # ---- kernel 3: fused BN2+ReLU + conv2(3x3) + 1x1 shortcut (one matmul) ---
    cp2 = _round_up(OC, 8)
    cat_pad = _round_up(C, 8)
    Kfull = 9 * cp2 + cat_pad
    w2p = _pack_w3x3(params["w2"], cp2)                      # (OC, 9*cp2) bf16
    wsp = jnp.pad(params["ws"].T,
                  ((0, 0), (0, cat_pad - C))).astype(jnp.bfloat16)   # (OC, cat_pad)
    w_full = jnp.concatenate([w2p, wsp], axis=1)             # (OC, Kfull)
    b_full = (params["b2"] + params["bs"]).reshape(OC, 1)

    k3 = functools.partial(_bn_conv3x3_shortcut_kernel, W2, cp2, cat_pad)
    out_f = pl.pallas_call(
        k3,
        out_shape=jax.ShapeDtypeStruct((N, OC, P), f32),
        grid=(N,),
        in_specs=[
            pl.BlockSpec((1, OC, P), lambda n: (n, 0, 0)),
            pl.BlockSpec((1, Cin, P), lambda n: (n, 0, 0)),
            pl.BlockSpec((1, Csk, P), lambda n: (n, 0, 0)),
            pl.BlockSpec((OC, 1), lambda n: (0, 0)),
            pl.BlockSpec((OC, 1), lambda n: (0, 0)),
            pl.BlockSpec((OC, Kfull), lambda n: (0, 0)),
            pl.BlockSpec((OC, 1), lambda n: (0, 0)),
            pl.BlockSpec((9, P), lambda n: (0, 0)),
        ],
        out_specs=pl.BlockSpec((1, OC, P), lambda n: (n, 0, 0)),
        scratch_shapes=[pltpu.VMEM((Kfull, P), f32)],
        compiler_params=pltpu.CompilerParams(
            dimension_semantics=("parallel",)),
    )(x1_f, up_f, sk_f,
      scale2.reshape(OC, 1), bias2.reshape(OC, 1),
      w_full, b_full, masks)

    # (N, OC, H*W) is already NCHW-flat -> free reshape, no transpose.
    return out_f.reshape(N, OC, H2, W2)


# ---------------------------------------------------------------------------
# Pure-JAX f32 reference (same semantics as the PyTorch module in train mode)
# ---------------------------------------------------------------------------
def _ref_bn_relu(x, g, b, eps=1e-5):
    mean = x.mean(axis=(0, 2, 3), keepdims=True)
    var = x.var(axis=(0, 2, 3), keepdims=True)          # biased
    y = (x - mean) / jnp.sqrt(var + eps)
    return jnp.maximum(y * g.reshape(1, -1, 1, 1) + b.reshape(1, -1, 1, 1), 0.0)


def _ref_conv(x, w_hwio, b, pad):
    y = jax.lax.conv_general_dilated(
        x, w_hwio, (1, 1), [(pad, pad), (pad, pad)],
        dimension_numbers=("NCHW", "HWIO", "NCHW"))
    return y + b.reshape(1, -1, 1, 1)


def ref_forward(params, inputs_nchw, skip_nchw):
    up = upsample2x_bilinear_ac(inputs_nchw)
    cat = jnp.concatenate([up, skip_nchw], axis=1)
    y1 = _ref_bn_relu(cat, params["g1"], params["be1"])
    x1 = _ref_conv(y1, params["w1"], params["b1"], 1)
    y2 = _ref_bn_relu(x1, params["g2"], params["be2"])
    x2 = _ref_conv(y2, params["w2"], params["b2"], 1)
    s = _ref_conv(cat, params["ws"].reshape(1, 1, *params["ws"].shape),
                  params["bs"], 0)
    return x2 + s


# ---------------------------------------------------------------------------
# Main
# ---------------------------------------------------------------------------
if __name__ == "__main__":
    in_c, out_c = 8, 4
    N, H, W = 2, 8, 8                               # skip is at 2x this spatial
    cat_c = in_c + out_c

    key = jax.random.PRNGKey(0)
    k = jax.random.split(key, 8)
    params = {
        # batchnorm_relu params (PyTorch default init: weight=1, bias=0)
        "g1": jnp.ones((cat_c,), jnp.float32),
        "be1": jnp.zeros((cat_c,), jnp.float32),
        "g2": jnp.ones((out_c,), jnp.float32),
        "be2": jnp.zeros((out_c,), jnp.float32),
        # conv weights in HWIO layout (deterministic synthetic init)
        "w1": 0.1 * jax.random.normal(k[0], (3, 3, cat_c, out_c), jnp.float32),
        "b1": 0.1 * jax.random.normal(k[1], (out_c,), jnp.float32),
        "w2": 0.1 * jax.random.normal(k[2], (3, 3, out_c, out_c), jnp.float32),
        "b2": 0.1 * jax.random.normal(k[3], (out_c,), jnp.float32),
        "ws": 0.1 * jax.random.normal(k[4], (cat_c, out_c), jnp.float32),
        "bs": 0.1 * jax.random.normal(k[5], (out_c,), jnp.float32),
    }

    inputs = jax.random.normal(k[6], (N, in_c, H, W), jnp.float32)          # NCHW
    skip = jax.random.normal(k[7], (N, out_c, 2 * H, 2 * W), jnp.float32)   # NCHW

    out = jax.block_until_ready(jax.jit(decoder_block_forward)(params, inputs, skip))
    assert out.shape == (N, out_c, 2 * H, 2 * W), out.shape

    ref = jax.block_until_ready(ref_forward(params, inputs, skip))
    max_err = float(jnp.max(jnp.abs(out - ref)))
    assert max_err < 5e-2, f"mismatch vs reference: {max_err}"

    print("KERNEL_OK")
</pallas_src>

<mosaic_0001>
module attributes {stable_mosaic.version = 11 : i64} {
  func.func @_cat_stats_kernel(%arg0: i32, %arg1: memref<1x8x256xf32, #tpu.memory_space<vmem>>, %arg2: memref<1x4x256xf32, #tpu.memory_space<vmem>>, %arg3: memref<8x1xf32, #tpu.memory_space<vmem>>, %arg4: memref<8x1xf32, #tpu.memory_space<vmem>>, %arg5: memref<4x1xf32, #tpu.memory_space<vmem>>, %arg6: memref<4x1xf32, #tpu.memory_space<vmem>>) attributes {dimension_semantics = [#tpu.dimension_semantics<arbitrary>], iteration_bounds = array<i64: 2>, scalar_prefetch = 0 : i64, scratch_operands = 0 : i64, tpu.core_type = #tpu.core_type<tc>, window_params = [{transform_indices = @transform_0, window_bounds = array<i64: 1, 8, 256>}, {transform_indices = @transform_1, window_bounds = array<i64: 1, 4, 256>}, {pipeline_mode = #tpu.pipeline_mode<synchronous>, transform_indices = @transform_2, window_bounds = array<i64: 8, 1>}, {pipeline_mode = #tpu.pipeline_mode<synchronous>, transform_indices = @transform_3, window_bounds = array<i64: 8, 1>}, {pipeline_mode = #tpu.pipeline_mode<synchronous>, transform_indices = @transform_4, window_bounds = array<i64: 4, 1>}, {pipeline_mode = #tpu.pipeline_mode<synchronous>, transform_indices = @transform_5, window_bounds = array<i64: 4, 1>}]} {
    %c0_i32 = arith.constant 0 : i32
    %0 = arith.cmpi eq, %arg0, %c0_i32 : i32
    %1 = arith.extui %0 : i1 to i32
    %c0_i32_0 = arith.constant 0 : i32
    %2 = arith.cmpi ne, %1, %c0_i32_0 : i32
    scf.if %2 {
      %cst_25 = arith.constant 0.000000e+00 : f32
      %29 = vector.broadcast %cst_25 : f32 to vector<8x1xf32>
      %c0_26 = arith.constant 0 : index
      %c0_27 = arith.constant 0 : index
      %30 = vector.load %arg3[%c0_26, %c0_27] : memref<8x1xf32, #tpu.memory_space<vmem>>, vector<8x1xf32>
      tpu.vector_store %arg3[%c0_26, %c0_27], %29 {strides = array<i32>} : memref<8x1xf32, #tpu.memory_space<vmem>>, vector<8x1xf32>,
      %cst_28 = arith.constant 0.000000e+00 : f32
      %31 = vector.broadcast %cst_28 : f32 to vector<8x1xf32>
      %c0_29 = arith.constant 0 : index
      %c0_30 = arith.constant 0 : index
      %32 = vector.load %arg4[%c0_29, %c0_30] : memref<8x1xf32, #tpu.memory_space<vmem>>, vector<8x1xf32>
      tpu.vector_store %arg4[%c0_29, %c0_30], %31 {strides = array<i32>} : memref<8x1xf32, #tpu.memory_space<vmem>>, vector<8x1xf32>,
      %cst_31 = arith.constant 0.000000e+00 : f32
      %33 = vector.broadcast %cst_31 : f32 to vector<4x1xf32>
      %c0_32 = arith.constant 0 : index
      %c0_33 = arith.constant 0 : index
      %34 = vector.load %arg5[%c0_32, %c0_33] : memref<4x1xf32, #tpu.memory_space<vmem>>, vector<4x1xf32>
      tpu.vector_store %arg5[%c0_32, %c0_33], %33 {strides = array<i32>} : memref<4x1xf32, #tpu.memory_space<vmem>>, vector<4x1xf32>,
      %cst_34 = arith.constant 0.000000e+00 : f32
      %35 = vector.broadcast %cst_34 : f32 to vector<4x1xf32>
      %c0_35 = arith.constant 0 : index
      %c0_36 = arith.constant 0 : index
      %36 = vector.load %arg6[%c0_35, %c0_36] : memref<4x1xf32, #tpu.memory_space<vmem>>, vector<4x1xf32>
      tpu.vector_store %arg6[%c0_35, %c0_36], %35 {strides = array<i32>} : memref<4x1xf32, #tpu.memory_space<vmem>>, vector<4x1xf32>,
    } else {
    }
    %c0 = arith.constant 0 : index
    %c0_1 = arith.constant 0 : index
    %c0_2 = arith.constant 0 : index
    %3 = vector.load %arg1[%c0, %c0_1, %c0_2] : memref<1x8x256xf32, #tpu.memory_space<vmem>>, vector<1x8x256xf32>
    %4 = vector.shape_cast %3 : vector<1x8x256xf32> to vector<8x256xf32>
    %c0_3 = arith.constant 0 : index
    %c0_4 = arith.constant 0 : index
    %c0_5 = arith.constant 0 : index
    %5 = vector.load %arg2[%c0_3, %c0_4, %c0_5] : memref<1x4x256xf32, #tpu.memory_space<vmem>>, vector<1x4x256xf32>
    %6 = vector.shape_cast %5 : vector<1x4x256xf32> to vector<4x256xf32>
    %c0_6 = arith.constant 0 : index
    %c0_7 = arith.constant 0 : index
    %7 = vector.load %arg3[%c0_6, %c0_7] : memref<8x1xf32, #tpu.memory_space<vmem>>, vector<8x1xf32>
    %cst = arith.constant dense<0.000000e+00> : vector<8xf32>
    %8 = vector.multi_reduction <add>, %4, %cst [1] : vector<8x256xf32> to vector<8xf32>
    %9 = vector.shape_cast %8 : vector<8xf32> to vector<8x1xf32>
    %10 = arith.addf %7, %9 : vector<8x1xf32>
    %c0_8 = arith.constant 0 : index
    %c0_9 = arith.constant 0 : index
    %11 = vector.load %arg3[%c0_8, %c0_9] : memref<8x1xf32, #tpu.memory_space<vmem>>, vector<8x1xf32>
    tpu.vector_store %arg3[%c0_8, %c0_9], %10 {strides = array<i32>} : memref<8x1xf32, #tpu.memory_space<vmem>>, vector<8x1xf32>,
    %c0_10 = arith.constant 0 : index
    %c0_11 = arith.constant 0 : index
    %12 = vector.load %arg4[%c0_10, %c0_11] : memref<8x1xf32, #tpu.memory_space<vmem>>, vector<8x1xf32>
    %13 = arith.mulf %4, %4 : vector<8x256xf32>
    %cst_12 = arith.constant dense<0.000000e+00> : vector<8xf32>
    %14 = vector.multi_reduction <add>, %13, %cst_12 [1] : vector<8x256xf32> to vector<8xf32>
    %15 = vector.shape_cast %14 : vector<8xf32> to vector<8x1xf32>
    %16 = arith.addf %12, %15 : vector<8x1xf32>
    %c0_13 = arith.constant 0 : index
    %c0_14 = arith.constant 0 : index
    %17 = vector.load %arg4[%c0_13, %c0_14] : memref<8x1xf32, #tpu.memory_space<vmem>>, vector<8x1xf32>
    tpu.vector_store %arg4[%c0_13, %c0_14], %16 {strides = array<i32>} : memref<8x1xf32, #tpu.memory_space<vmem>>, vector<8x1xf32>,
    %c0_15 = arith.constant 0 : index
    %c0_16 = arith.constant 0 : index
    %18 = vector.load %arg5[%c0_15, %c0_16] : memref<4x1xf32, #tpu.memory_space<vmem>>, vector<4x1xf32>
    %cst_17 = arith.constant dense<0.000000e+00> : vector<4xf32>
    %19 = vector.multi_reduction <add>, %6, %cst_17 [1] : vector<4x256xf32> to vector<4xf32>
    %20 = vector.shape_cast %19 : vector<4xf32> to vector<4x1xf32>
    %21 = arith.addf %18, %20 : vector<4x1xf32>
    %c0_18 = arith.constant 0 : index
    %c0_19 = arith.constant 0 : index
    %22 = vector.load %arg5[%c0_18, %c0_19] : memref<4x1xf32, #tpu.memory_space<vmem>>, vector<4x1xf32>
    tpu.vector_store %arg5[%c0_18, %c0_19], %21 {strides = array<i32>} : memref<4x1xf32, #tpu.memory_space<vmem>>, vector<4x1xf32>,
    %c0_20 = arith.constant 0 : index
    %c0_21 = arith.constant 0 : index
    %23 = vector.load %arg6[%c0_20, %c0_21] : memref<4x1xf32, #tpu.memory_space<vmem>>, vector<4x1xf32>
    %24 = arith.mulf %6, %6 : vector<4x256xf32>
    %cst_22 = arith.constant dense<0.000000e+00> : vector<4xf32>
    %25 = vector.multi_reduction <add>, %24, %cst_22 [1] : vector<4x256xf32> to vector<4xf32>
    %26 = vector.shape_cast %25 : vector<4xf32> to vector<4x1xf32>
    %27 = arith.addf %23, %26 : vector<4x1xf32>
    %c0_23 = arith.constant 0 : index
    %c0_24 = arith.constant 0 : index
    %28 = vector.load %arg6[%c0_23, %c0_24] : memref<4x1xf32, #tpu.memory_space<vmem>>, vector<4x1xf32>
    tpu.vector_store %arg6[%c0_23, %c0_24], %27 {strides = array<i32>} : memref<4x1xf32, #tpu.memory_space<vmem>>, vector<4x1xf32>,
    return
  }
  func.func @transform_0(%arg0: i32) -> (i32, i32, i32) {
    %c0_i32 = arith.constant 0 : i32
    %c0_i32_0 = arith.constant 0 : i32
    %c0_i32_1 = arith.constant 0 : i32
    return %arg0, %c0_i32, %c0_i32_0 : i32, i32, i32
  }
  func.func @transform_1(%arg0: i32) -> (i32, i32, i32) {
    %c0_i32 = arith.constant 0 : i32
    %c0_i32_0 = arith.constant 0 : i32
    %c0_i32_1 = arith.constant 0 : i32
    return %arg0, %c0_i32, %c0_i32_0 : i32, i32, i32
  }
  func.func @transform_2(%arg0: i32) -> (i32, i32) {
    %c0_i32 = arith.constant 0 : i32
    %c0_i32_0 = arith.constant 0 : i32
    %c0_i32_1 = arith.constant 0 : i32
    return %c0_i32, %c0_i32_0 : i32, i32
  }
  func.func @transform_3(%arg0: i32) -> (i32, i32) {
    %c0_i32 = arith.constant 0 : i32
    %c0_i32_0 = arith.constant 0 : i32
    %c0_i32_1 = arith.constant 0 : i32
    return %c0_i32, %c0_i32_0 : i32, i32
  }
  func.func @transform_4(%arg0: i32) -> (i32, i32) {
    %c0_i32 = arith.constant 0 : i32
    %c0_i32_0 = arith.constant 0 : i32
    %c0_i32_1 = arith.constant 0 : i32
    return %c0_i32, %c0_i32_0 : i32, i32
  }
  func.func @transform_5(%arg0: i32) -> (i32, i32) {
    %c0_i32 = arith.constant 0 : i32
    %c0_i32_0 = arith.constant 0 : i32
    %c0_i32_1 = arith.constant 0 : i32
    return %c0_i32, %c0_i32_0 : i32, i32
  }
}

module attributes {stable_mosaic.version = 11 : i64} {
  func.func @_bn_conv3x3_stats_kernel(%arg0: i32, %arg1: memref<1x8x256xf32, #tpu.memory_space<vmem>>, %arg2: memref<1x4x256xf32, #tpu.memory_space<vmem>>, %arg3: memref<8x1xf32, #tpu.memory_space<vmem>>, %arg4: memref<8x1xf32, #tpu.memory_space<vmem>>, %arg5: memref<4x1xf32, #tpu.memory_space<vmem>>, %arg6: memref<4x1xf32, #tpu.memory_space<vmem>>, %arg7: memref<4x144xbf16, #tpu.memory_space<vmem>>, %arg8: memref<4x1xf32, #tpu.memory_space<vmem>>, %arg9: memref<9x256xf32, #tpu.memory_space<vmem>>, %arg10: memref<1x4x256xf32, #tpu.memory_space<vmem>>, %arg11: memref<4x1xf32, #tpu.memory_space<vmem>>, %arg12: memref<4x1xf32, #tpu.memory_space<vmem>>, %arg13: memref<144x256xf32, #tpu.memory_space<vmem>>) attributes {dimension_semantics = [#tpu.dimension_semantics<arbitrary>], iteration_bounds = array<i64: 2>, scalar_prefetch = 0 : i64, scratch_operands = 1 : i64, tpu.core_type = #tpu.core_type<tc>, window_params = [{transform_indices = @transform_0, window_bounds = array<i64: 1, 8, 256>}, {transform_indices = @transform_1, window_bounds = array<i64: 1, 4, 256>}, {pipeline_mode = #tpu.pipeline_mode<synchronous>, transform_indices = @transform_2, window_bounds = array<i64: 8, 1>}, {pipeline_mode = #tpu.pipeline_mode<synchronous>, transform_indices = @transform_3, window_bounds = array<i64: 8, 1>}, {pipeline_mode = #tpu.pipeline_mode<synchronous>, transform_indices = @transform_4, window_bounds = array<i64: 4, 1>}, {pipeline_mode = #tpu.pipeline_mode<synchronous>, transform_indices = @transform_5, window_bounds = array<i64: 4, 1>}, {pipeline_mode = #tpu.pipeline_mode<synchronous>, transform_indices = @transform_6, window_bounds = array<i64: 4, 144>}, {pipeline_mode = #tpu.pipeline_mode<synchronous>, transform_indices = @transform_7, window_bounds = array<i64: 4, 1>}, {pipeline_mode = #tpu.pipeline_mode<synchronous>, transform_indices = @transform_8, window_bounds = array<i64: 9, 256>}, {transform_indices = @transform_9, window_bounds = array<i64: 1, 4, 256>}, {pipeline_mode = #tpu.pipeline_mode<synchronous>, transform_indices = @transform_10, window_bounds = array<i64: 4, 1>}, {pipeline_mode = #tpu.pipeline_mode<synchronous>, transform_indices = @transform_11, window_bounds = array<i64: 4, 1>}]} {
    %c0_i32 = arith.constant 0 : i32
    %0 = arith.cmpi eq, %arg0, %c0_i32 : i32
    %1 = arith.extui %0 : i1 to i32
    %c0_i32_0 = arith.constant 0 : i32
    %2 = arith.cmpi ne, %1, %c0_i32_0 : i32
    scf.if %2 {
      %cst_48 = arith.constant 0.000000e+00 : f32
      %91 = vector.broadcast %cst_48 : f32 to vector<4x1xf32>
      %c0_49 = arith.constant 0 : index
      %c0_50 = arith.constant 0 : index
      %92 = vector.load %arg11[%c0_49, %c0_50] : memref<4x1xf32, #tpu.memory_space<vmem>>, vector<4x1xf32>
      tpu.vector_store %arg11[%c0_49, %c0_50], %91 {strides = array<i32>} : memref<4x1xf32, #tpu.memory_space<vmem>>, vector<4x1xf32>,
      %cst_51 = arith.constant 0.000000e+00 : f32
      %93 = vector.broadcast %cst_51 : f32 to vector<4x1xf32>
      %c0_52 = arith.constant 0 : index
      %c0_53 = arith.constant 0 : index
      %94 = vector.load %arg12[%c0_52, %c0_53] : memref<4x1xf32, #tpu.memory_space<vmem>>, vector<4x1xf32>
      tpu.vector_store %arg12[%c0_52, %c0_53], %93 {strides = array<i32>} : memref<4x1xf32, #tpu.memory_space<vmem>>, vector<4x1xf32>,
    } else {
    }
    %c0 = arith.constant 0 : index
    %c0_1 = arith.constant 0 : index
    %c0_2 = arith.constant 0 : index
    %3 = vector.load %arg1[%c0, %c0_1, %c0_2] : memref<1x8x256xf32, #tpu.memory_space<vmem>>, vector<1x8x256xf32>
    %4 = vector.shape_cast %3 : vector<1x8x256xf32> to vector<8x256xf32>
    %c0_3 = arith.constant 0 : index
    %c0_4 = arith.constant 0 : index
    %5 = vector.load %arg3[%c0_3, %c0_4] : memref<8x1xf32, #tpu.memory_space<vmem>>, vector<8x1xf32>
    %6 = vector.broadcast %5 : vector<8x1xf32> to vector<8x256xf32>
    %7 = arith.mulf %4, %6 : vector<8x256xf32>
    %c0_5 = arith.constant 0 : index
    %c0_6 = arith.constant 0 : index
    %8 = vector.load %arg4[%c0_5, %c0_6] : memref<8x1xf32, #tpu.memory_space<vmem>>, vector<8x1xf32>
    %9 = vector.broadcast %8 : vector<8x1xf32> to vector<8x256xf32>
    %10 = arith.addf %7, %9 : vector<8x256xf32>
    %cst = arith.constant 0.000000e+00 : f32
    %11 = vector.broadcast %cst : f32 to vector<8x256xf32>
    %12 = arith.maximumf %10, %11 : vector<8x256xf32>
    %c0_7 = arith.constant 0 : index
    %c0_8 = arith.constant 0 : index
    %c0_9 = arith.constant 0 : index
    %13 = vector.load %arg2[%c0_7, %c0_8, %c0_9] : memref<1x4x256xf32, #tpu.memory_space<vmem>>, vector<1x4x256xf32>
    %14 = vector.shape_cast %13 : vector<1x4x256xf32> to vector<4x256xf32>
    %c0_10 = arith.constant 0 : index
    %c0_11 = arith.constant 0 : index
    %15 = vector.load %arg5[%c0_10, %c0_11] : memref<4x1xf32, #tpu.memory_space<vmem>>, vector<4x1xf32>
    %16 = vector.broadcast %15 : vector<4x1xf32> to vector<4x256xf32>
    %17 = arith.mulf %14, %16 : vector<4x256xf32>
    %c0_12 = arith.constant 0 : index
    %c0_13 = arith.constant 0 : index
    %18 = vector.load %arg6[%c0_12, %c0_13] : memref<4x1xf32, #tpu.memory_space<vmem>>, vector<4x1xf32>
    %19 = vector.broadcast %18 : vector<4x1xf32> to vector<4x256xf32>
    %20 = arith.addf %17, %19 : vector<4x256xf32>
    %cst_14 = arith.constant 0.000000e+00 : f32
    %21 = vector.broadcast %cst_14 : f32 to vector<4x256xf32>
    %22 = arith.maximumf %20, %21 : vector<4x256xf32>
    %cst_15 = arith.constant 0.000000e+00 : f32
    %23 = vector.broadcast %cst_15 : f32 to vector<4x256xf32>
    %24 = tpu.concatenate %12, %22, %23 in 0 : vector<8x256xf32>, vector<4x256xf32>, vector<4x256xf32> -> vector<16x256xf32>
    %c0_16 = arith.constant 0 : index
    %c0_17 = arith.constant 0 : index
    %25 = vector.load %arg9[%c0_16, %c0_17] : memref<9x256xf32, #tpu.memory_space<vmem>>, vector<9x256xf32>
    %c17_i32 = arith.constant 17 : i32
    %26 = tpu.dynamic_rotate %24 by %c17_i32 dim 1 : vector<16x256xf32>, i32 -> vector<16x256xf32>
    %27 = vector.extract_strided_slice %25 {offsets = [0, 0], sizes = [1, 256], strides = [1, 1]} : vector<9x256xf32> to vector<1x256xf32>
    %28 = vector.broadcast %27 : vector<1x256xf32> to vector<16x256xf32>
    %29 = arith.mulf %26, %28 : vector<16x256xf32>
    %c0_18 = arith.constant 0 : index
    %c0_19 = arith.constant 0 : index
    %30 = vector.load %arg13[%c0_18, %c0_19] : memref<144x256xf32, #tpu.memory_space<vmem>>, vector<16x256xf32>
    tpu.vector_store %arg13[%c0_18, %c0_19], %29 {strides = array<i32>} : memref<144x256xf32, #tpu.memory_space<vmem>>, vector<16x256xf32>,
    %c16_i32 = arith.constant 16 : i32
    %31 = tpu.dynamic_rotate %24 by %c16_i32 dim 1 : vector<16x256xf32>, i32 -> vector<16x256xf32>
    %32 = vector.extract_strided_slice %25 {offsets = [1, 0], sizes = [1, 256], strides = [1, 1]} : vector<9x256xf32> to vector<1x256xf32>
    %33 = vector.broadcast %32 : vector<1x256xf32> to vector<16x256xf32>
    %34 = arith.mulf %31, %33 : vector<16x256xf32>
    %c16 = arith.constant 16 : index
    %c0_20 = arith.constant 0 : index
    %35 = vector.load %arg13[%c16, %c0_20] : memref<144x256xf32, #tpu.memory_space<vmem>>, vector<16x256xf32>
    tpu.vector_store %arg13[%c16, %c0_20], %34 {strides = array<i32>} : memref<144x256xf32, #tpu.memory_space<vmem>>, vector<16x256xf32>,
    %c15_i32 = arith.constant 15 : i32
    %36 = tpu.dynamic_rotate %24 by %c15_i32 dim 1 : vector<16x256xf32>, i32 -> vector<16x256xf32>
    %37 = vector.extract_strided_slice %25 {offsets = [2, 0], sizes = [1, 256], strides = [1, 1]} : vector<9x256xf32> to vector<1x256xf32>
    %38 = vector.broadcast %37 : vector<1x256xf32> to vector<16x256xf32>
    %39 = arith.mulf %36, %38 : vector<16x256xf32>
    %c32 = arith.constant 32 : index
    %c0_21 = arith.constant 0 : index
    %40 = vector.load %arg13[%c32, %c0_21] : memref<144x256xf32, #tpu.memory_space<vmem>>, vector<16x256xf32>
    tpu.vector_store %arg13[%c32, %c0_21], %39 {strides = array<i32>} : memref<144x256xf32, #tpu.memory_space<vmem>>, vector<16x256xf32>,
    %c1_i32 = arith.constant 1 : i32
    %41 = tpu.dynamic_rotate %24 by %c1_i32 dim 1 : vector<16x256xf32>, i32 -> vector<16x256xf32>
    %42 = vector.extract_strided_slice %25 {offsets = [3, 0], sizes = [1, 256], strides = [1, 1]} : vector<9x256xf32> to vector<1x256xf32>
    %43 = vector.broadcast %42 : vector<1x256xf32> to vector<16x256xf32>
    %44 = arith.mulf %41, %43 : vector<16x256xf32>
    %c48 = arith.constant 48 : index
    %c0_22 = arith.constant 0 : index
    %45 = vector.load %arg13[%c48, %c0_22] : memref<144x256xf32, #tpu.memory_space<vmem>>, vector<16x256xf32>
    tpu.vector_store %arg13[%c48, %c0_22], %44 {strides = array<i32>} : memref<144x256xf32, #tpu.memory_space<vmem>>, vector<16x256xf32>,
    %46 = vector.extract_strided_slice %25 {offsets = [4, 0], sizes = [1, 256], strides = [1, 1]} : vector<9x256xf32> to vector<1x256xf32>
    %47 = vector.broadcast %46 : vector<1x256xf32> to vector<16x256xf32>
    %48 = arith.mulf %24, %47 : vector<16x256xf32>
    %c64 = arith.constant 64 : index
    %c0_23 = arith.constant 0 : index
    %49 = vector.load %arg13[%c64, %c0_23] : memref<144x256xf32, #tpu.memory_space<vmem>>, vector<16x256xf32>
    tpu.vector_store %arg13[%c64, %c0_23], %48 {strides = array<i32>} : memref<144x256xf32, #tpu.memory_space<vmem>>, vector<16x256xf32>,
    %c255_i32 = arith.constant 255 : i32
    %50 = tpu.dynamic_rotate %24 by %c255_i32 dim 1 : vector<16x256xf32>, i32 -> vector<16x256xf32>
    %51 = vector.extract_strided_slice %25 {offsets = [5, 0], sizes = [1, 256], strides = [1, 1]} : vector<9x256xf32> to vector<1x256xf32>
    %52 = vector.broadcast %51 : vector<1x256xf32> to vector<16x256xf32>
    %53 = arith.mulf %50, %52 : vector<16x256xf32>
    %c80 = arith.constant 80 : index
    %c0_24 = arith.constant 0 : index
    %54 = vector.load %arg13[%c80, %c0_24] : memref<144x256xf32, #tpu.memory_space<vmem>>, vector<16x256xf32>
    tpu.vector_store %arg13[%c80, %c0_24], %53 {strides = array<i32>} : memref<144x256xf32, #tpu.memory_space<vmem>>, vector<16x256xf32>,
    %c241_i32 = arith.constant 241 : i32
    %55 = tpu.dynamic_rotate %24 by %c241_i32 dim 1 : vector<16x256xf32>, i32 -> vector<16x256xf32>
    %56 = vector.extract_strided_slice %25 {offsets = [6, 0], sizes = [1, 256], strides = [1, 1]} : vector<9x256xf32> to vector<1x256xf32>
    %57 = vector.broadcast %56 : vector<1x256xf32> to vector<16x256xf32>
    %58 = arith.mulf %55, %57 : vector<16x256xf32>
    %c96 = arith.constant 96 : index
    %c0_25 = arith.constant 0 : index
    %59 = vector.load %arg13[%c96, %c0_25] : memref<144x256xf32, #tpu.memory_space<vmem>>, vector<16x256xf32>
    tpu.vector_store %arg13[%c96, %c0_25], %58 {strides = array<i32>} : memref<144x256xf32, #tpu.memory_space<vmem>>, vector<16x256xf32>,
    %c240_i32 = arith.constant 240 : i32
    %60 = tpu.dynamic_rotate %24 by %c240_i32 dim 1 : vector<16x256xf32>, i32 -> vector<16x256xf32>
    %61 = vector.extract_strided_slice %25 {offsets = [7, 0], sizes = [1, 256], strides = [1, 1]} : vector<9x256xf32> to vector<1x256xf32>
    %62 = vector.broadcast %61 : vector<1x256xf32> to vector<16x256xf32>
    %63 = arith.mulf %60, %62 : vector<16x256xf32>
    %c112 = arith.constant 112 : index
    %c0_26 = arith.constant 0 : index
    %64 = vector.load %arg13[%c112, %c0_26] : memref<144x256xf32, #tpu.memory_space<vmem>>, vector<16x256xf32>
    tpu.vector_store %arg13[%c112, %c0_26], %63 {strides = array<i32>} : memref<144x256xf32, #tpu.memory_space<vmem>>, vector<16x256xf32>,
    %c239_i32 = arith.constant 239 : i32
    %65 = tpu.dynamic_rotate %24 by %c239_i32 dim 1 : vector<16x256xf32>, i32 -> vector<16x256xf32>
    %66 = vector.extract_strided_slice %25 {offsets = [8, 0], sizes = [1, 256], strides = [1, 1]} : vector<9x256xf32> to vector<1x256xf32>
    %67 = vector.broadcast %66 : vector<1x256xf32> to vector<16x256xf32>
    %68 = arith.mulf %65, %67 : vector<16x256xf32>
    %c128 = arith.constant 128 : index
    %c0_27 = arith.constant 0 : index
    %69 = vector.load %arg13[%c128, %c0_27] : memref<144x256xf32, #tpu.memory_space<vmem>>, vector<16x256xf32>
    tpu.vector_store %arg13[%c128, %c0_27], %68 {strides = array<i32>} : memref<144x256xf32, #tpu.memory_space<vmem>>, vector<16x256xf32>,
    %c0_28 = arith.constant 0 : index
    %c0_29 = arith.constant 0 : index
    %70 = vector.load %arg13[%c0_28, %c0_29] : memref<144x256xf32, #tpu.memory_space<vmem>>, vector<144x256xf32>
    %71 = arith.truncf %70 : vector<144x256xf32> to vector<144x256xbf16>
    %c0_30 = arith.constant 0 : index
    %c0_31 = arith.constant 0 : index
    %72 = vector.load %arg7[%c0_30, %c0_31] : memref<4x144xbf16, #tpu.memory_space<vmem>>, vector<4x144xbf16>
    %cst_32 = arith.constant dense<0.000000e+00> : vector<4x256xf32>
    %73 = tpu.matmul %72, %71, %cst_32 {dimension_numbers = #tpu.dot_dimension_numbers<[1], [0], [0], [1], [0, 0, 1, 1], [], []>} : vector<4x144xbf16>, vector<144x256xbf16>, vector<4x256xf32> -> vector<4x256xf32>
    %c0_33 = arith.constant 0 : index
    %c0_34 = arith.constant 0 : index
    %74 = vector.load %arg8[%c0_33, %c0_34] : memref<4x1xf32, #tpu.memory_space<vmem>>, vector<4x1xf32>
    %75 = vector.broadcast %74 : vector<4x1xf32> to vector<4x256xf32>
    %76 = arith.addf %73, %75 : vector<4x256xf32>
    %c0_35 = arith.constant 0 : index
    %c0_36 = arith.constant 0 : index
    %c0_37 = arith.constant 0 : index
    %77 = vector.load %arg10[%c0_35, %c0_36, %c0_37] : memref<1x4x256xf32, #tpu.memory_space<vmem>>, vector<1x4x256xf32>
    %78 = vector.shape_cast %77 : vector<1x4x256xf32> to vector<4x256xf32>
    %79 = vector.shape_cast %76 : vector<4x256xf32> to vector<1x4x256xf32>
    tpu.vector_store %arg10[%c0_35, %c0_36, %c0_37], %79 {strides = array<i32>} : memref<1x4x256xf32, #tpu.memory_space<vmem>>, vector<1x4x256xf32>,
    %c0_38 = arith.constant 0 : index
    %c0_39 = arith.constant 0 : index
    %80 = vector.load %arg11[%c0_38, %c0_39] : memref<4x1xf32, #tpu.memory_space<vmem>>, vector<4x1xf32>
    %cst_40 = arith.constant dense<0.000000e+00> : vector<4xf32>
    %81 = vector.multi_reduction <add>, %76, %cst_40 [1] : vector<4x256xf32> to vector<4xf32>
    %82 = vector.shape_cast %81 : vector<4xf32> to vector<4x1xf32>
    %83 = arith.addf %80, %82 : vector<4x1xf32>
    %c0_41 = arith.constant 0 : index
    %c0_42 = arith.constant 0 : index
    %84 = vector.load %arg11[%c0_41, %c0_42] : memref<4x1xf32, #tpu.memory_space<vmem>>, vector<4x1xf32>
    tpu.vector_store %arg11[%c0_41, %c0_42], %83 {strides = array<i32>} : memref<4x1xf32, #tpu.memory_space<vmem>>, vector<4x1xf32>,
    %c0_43 = arith.constant 0 : index
    %c0_44 = arith.constant 0 : index
    %85 = vector.load %arg12[%c0_43, %c0_44] : memref<4x1xf32, #tpu.memory_space<vmem>>, vector<4x1xf32>
    %86 = arith.mulf %76, %76 : vector<4x256xf32>
    %cst_45 = arith.constant dense<0.000000e+00> : vector<4xf32>
    %87 = vector.multi_reduction <add>, %86, %cst_45 [1] : vector<4x256xf32> to vector<4xf32>
    %88 = vector.shape_cast %87 : vector<4xf32> to vector<4x1xf32>
    %89 = arith.addf %85, %88 : vector<4x1xf32>
    %c0_46 = arith.constant 0 : index
    %c0_47 = arith.constant 0 : index
    %90 = vector.load %arg12[%c0_46, %c0_47] : memref<4x1xf32, #tpu.memory_space<vmem>>, vector<4x1xf32>
    tpu.vector_store %arg12[%c0_46, %c0_47], %89 {strides = array<i32>} : memref<4x1xf32, #tpu.memory_space<vmem>>, vector<4x1xf32>,
    return
  }
  func.func @transform_0(%arg0: i32) -> (i32, i32, i32) {
    %c0_i32 = arith.constant 0 : i32
    %c0_i32_0 = arith.constant 0 : i32
    %c0_i32_1 = arith.constant 0 : i32
    return %arg0, %c0_i32, %c0_i32_0 : i32, i32, i32
  }
  func.func @transform_1(%arg0: i32) -> (i32, i32, i32) {
    %c0_i32 = arith.constant 0 : i32
    %c0_i32_0 = arith.constant 0 : i32
    %c0_i32_1 = arith.constant 0 : i32
    return %arg0, %c0_i32, %c0_i32_0 : i32, i32, i32
  }
  func.func @transform_2(%arg0: i32) -> (i32, i32) {
    %c0_i32 = arith.constant 0 : i32
    %c0_i32_0 = arith.constant 0 : i32
    %c0_i32_1 = arith.constant 0 : i32
    return %c0_i32, %c0_i32_0 : i32, i32
  }
  func.func @transform_3(%arg0: i32) -> (i32, i32) {
    %c0_i32 = arith.constant 0 : i32
    %c0_i32_0 = arith.constant 0 : i32
    %c0_i32_1 = arith.constant 0 : i32
    return %c0_i32, %c0_i32_0 : i32, i32
  }
  func.func @transform_4(%arg0: i32) -> (i32, i32) {
    %c0_i32 = arith.constant 0 : i32
    %c0_i32_0 = arith.constant 0 : i32
    %c0_i32_1 = arith.constant 0 : i32
    return %c0_i32, %c0_i32_0 : i32, i32
  }
  func.func @transform_5(%arg0: i32) -> (i32, i32) {
    %c0_i32 = arith.constant 0 : i32
    %c0_i32_0 = arith.constant 0 : i32
    %c0_i32_1 = arith.constant 0 : i32
    return %c0_i32, %c0_i32_0 : i32, i32
  }
  func.func @transform_6(%arg0: i32) -> (i32, i32) {
    %c0_i32 = arith.constant 0 : i32
    %c0_i32_0 = arith.constant 0 : i32
    %c0_i32_1 = arith.constant 0 : i32
    return %c0_i32, %c0_i32_0 : i32, i32
  }
  func.func @transform_7(%arg0: i32) -> (i32, i32) {
    %c0_i32 = arith.constant 0 : i32
    %c0_i32_0 = arith.constant 0 : i32
    %c0_i32_1 = arith.constant 0 : i32
    return %c0_i32, %c0_i32_0 : i32, i32
  }
  func.func @transform_8(%arg0: i32) -> (i32, i32) {
    %c0_i32 = arith.constant 0 : i32
    %c0_i32_0 = arith.constant 0 : i32
    %c0_i32_1 = arith.constant 0 : i32
    return %c0_i32, %c0_i32_0 : i32, i32
  }
  func.func @transform_9(%arg0: i32) -> (i32, i32, i32) {
    %c0_i32 = arith.constant 0 : i32
    %c0_i32_0 = arith.constant 0 : i32
    %c0_i32_1 = arith.constant 0 : i32
    return %arg0, %c0_i32, %c0_i32_0 : i32, i32, i32
  }
  func.func @transform_10(%arg0: i32) -> (i32, i32) {
    %c0_i32 = arith.constant 0 : i32
    %c0_i32_0 = arith.constant 0 : i32
    %c0_i32_1 = arith.constant 0 : i32
    return %c0_i32, %c0_i32_0 : i32, i32
  }
  func.func @transform_11(%arg0: i32) -> (i32, i32) {
    %c0_i32 = arith.constant 0 : i32
    %c0_i32_0 = arith.constant 0 : i32
    %c0_i32_1 = arith.constant 0 : i32
    return %c0_i32, %c0_i32_0 : i32, i32
  }
}

module attributes {stable_mosaic.version = 11 : i64} {
  func.func @_bn_conv3x3_shortcut_kernel(%arg0: i32, %arg1: memref<1x4x256xf32, #tpu.memory_space<vmem>>, %arg2: memref<1x8x256xf32, #tpu.memory_space<vmem>>, %arg3: memref<1x4x256xf32, #tpu.memory_space<vmem>>, %arg4: memref<4x1xf32, #tpu.memory_space<vmem>>, %arg5: memref<4x1xf32, #tpu.memory_space<vmem>>, %arg6: memref<4x88xbf16, #tpu.memory_space<vmem>>, %arg7: memref<4x1xf32, #tpu.memory_space<vmem>>, %arg8: memref<9x256xf32, #tpu.memory_space<vmem>>, %arg9: memref<1x4x256xf32, #tpu.memory_space<vmem>>, %arg10: memref<88x256xf32, #tpu.memory_space<vmem>>) attributes {dimension_semantics = [#tpu.dimension_semantics<parallel>], iteration_bounds = array<i64: 2>, scalar_prefetch = 0 : i64, scratch_operands = 1 : i64, tpu.core_type = #tpu.core_type<tc>, window_params = [{transform_indices = @transform_0, window_bounds = array<i64: 1, 4, 256>}, {transform_indices = @transform_1, window_bounds = array<i64: 1, 8, 256>}, {transform_indices = @transform_2, window_bounds = array<i64: 1, 4, 256>}, {pipeline_mode = #tpu.pipeline_mode<synchronous>, transform_indices = @transform_3, window_bounds = array<i64: 4, 1>}, {pipeline_mode = #tpu.pipeline_mode<synchronous>, transform_indices = @transform_4, window_bounds = array<i64: 4, 1>}, {pipeline_mode = #tpu.pipeline_mode<synchronous>, transform_indices = @transform_5, window_bounds = array<i64: 4, 88>}, {pipeline_mode = #tpu.pipeline_mode<synchronous>, transform_indices = @transform_6, window_bounds = array<i64: 4, 1>}, {pipeline_mode = #tpu.pipeline_mode<synchronous>, transform_indices = @transform_7, window_bounds = array<i64: 9, 256>}, {transform_indices = @transform_8, window_bounds = array<i64: 1, 4, 256>}]} {
    %c0 = arith.constant 0 : index
    %c0_0 = arith.constant 0 : index
    %c0_1 = arith.constant 0 : index
    %0 = vector.load %arg1[%c0, %c0_0, %c0_1] : memref<1x4x256xf32, #tpu.memory_space<vmem>>, vector<1x4x256xf32>
    %1 = vector.shape_cast %0 : vector<1x4x256xf32> to vector<4x256xf32>
    %c0_2 = arith.constant 0 : index
    %c0_3 = arith.constant 0 : index
    %2 = vector.load %arg4[%c0_2, %c0_3] : memref<4x1xf32, #tpu.memory_space<vmem>>, vector<4x1xf32>
    %3 = vector.broadcast %2 : vector<4x1xf32> to vector<4x256xf32>
    %4 = arith.mulf %1, %3 : vector<4x256xf32>
    %c0_4 = arith.constant 0 : index
    %c0_5 = arith.constant 0 : index
    %5 = vector.load %arg5[%c0_4, %c0_5] : memref<4x1xf32, #tpu.memory_space<vmem>>, vector<4x1xf32>
    %6 = vector.broadcast %5 : vector<4x1xf32> to vector<4x256xf32>
    %7 = arith.addf %4, %6 : vector<4x256xf32>
    %cst = arith.constant 0.000000e+00 : f32
    %8 = vector.broadcast %cst : f32 to vector<4x256xf32>
    %9 = arith.maximumf %7, %8 : vector<4x256xf32>
    %cst_6 = arith.constant 0.000000e+00 : f32
    %10 = vector.broadcast %cst_6 : f32 to vector<4x256xf32>
    %11 = tpu.concatenate %9, %10 in 0 : vector<4x256xf32>, vector<4x256xf32> -> vector<8x256xf32>
    %c0_7 = arith.constant 0 : index
    %c0_8 = arith.constant 0 : index
    %12 = vector.load %arg8[%c0_7, %c0_8] : memref<9x256xf32, #tpu.memory_space<vmem>>, vector<9x256xf32>
    %c17_i32 = arith.constant 17 : i32
    %13 = tpu.dynamic_rotate %11 by %c17_i32 dim 1 : vector<8x256xf32>, i32 -> vector<8x256xf32>
    %14 = vector.extract_strided_slice %12 {offsets = [0, 0], sizes = [1, 256], strides = [1, 1]} : vector<9x256xf32> to vector<1x256xf32>
    %15 = vector.broadcast %14 : vector<1x256xf32> to vector<8x256xf32>
    %16 = arith.mulf %13, %15 : vector<8x256xf32>
    %c0_9 = arith.constant 0 : index
    %c0_10 = arith.constant 0 : index
    %17 = vector.load %arg10[%c0_9, %c0_10] : memref<88x256xf32, #tpu.memory_space<vmem>>, vector<8x256xf32>
    tpu.vector_store %arg10[%c0_9, %c0_10], %16 {strides = array<i32>} : memref<88x256xf32, #tpu.memory_space<vmem>>, vector<8x256xf32>,
    %c16_i32 = arith.constant 16 : i32
    %18 = tpu.dynamic_rotate %11 by %c16_i32 dim 1 : vector<8x256xf32>, i32 -> vector<8x256xf32>
    %19 = vector.extract_strided_slice %12 {offsets = [1, 0], sizes = [1, 256], strides = [1, 1]} : vector<9x256xf32> to vector<1x256xf32>
    %20 = vector.broadcast %19 : vector<1x256xf32> to vector<8x256xf32>
    %21 = arith.mulf %18, %20 : vector<8x256xf32>
    %c8 = arith.constant 8 : index
    %c0_11 = arith.constant 0 : index
    %22 = vector.load %arg10[%c8, %c0_11] : memref<88x256xf32, #tpu.memory_space<vmem>>, vector<8x256xf32>
    tpu.vector_store %arg10[%c8, %c0_11], %21 {strides = array<i32>} : memref<88x256xf32, #tpu.memory_space<vmem>>, vector<8x256xf32>,
    %c15_i32 = arith.constant 15 : i32
    %23 = tpu.dynamic_rotate %11 by %c15_i32 dim 1 : vector<8x256xf32>, i32 -> vector<8x256xf32>
    %24 = vector.extract_strided_slice %12 {offsets = [2, 0], sizes = [1, 256], strides = [1, 1]} : vector<9x256xf32> to vector<1x256xf32>
    %25 = vector.broadcast %24 : vector<1x256xf32> to vector<8x256xf32>
    %26 = arith.mulf %23, %25 : vector<8x256xf32>
    %c16 = arith.constant 16 : index
    %c0_12 = arith.constant 0 : index
    %27 = vector.load %arg10[%c16, %c0_12] : memref<88x256xf32, #tpu.memory_space<vmem>>, vector<8x256xf32>
    tpu.vector_store %arg10[%c16, %c0_12], %26 {strides = array<i32>} : memref<88x256xf32, #tpu.memory_space<vmem>>, vector<8x256xf32>,
    %c1_i32 = arith.constant 1 : i32
    %28 = tpu.dynamic_rotate %11 by %c1_i32 dim 1 : vector<8x256xf32>, i32 -> vector<8x256xf32>
    %29 = vector.extract_strided_slice %12 {offsets = [3, 0], sizes = [1, 256], strides = [1, 1]} : vector<9x256xf32> to vector<1x256xf32>
    %30 = vector.broadcast %29 : vector<1x256xf32> to vector<8x256xf32>
    %31 = arith.mulf %28, %30 : vector<8x256xf32>
    %c24 = arith.constant 24 : index
    %c0_13 = arith.constant 0 : index
    %32 = vector.load %arg10[%c24, %c0_13] : memref<88x256xf32, #tpu.memory_space<vmem>>, vector<8x256xf32>
    tpu.vector_store %arg10[%c24, %c0_13], %31 {strides = array<i32>} : memref<88x256xf32, #tpu.memory_space<vmem>>, vector<8x256xf32>,
    %33 = vector.extract_strided_slice %12 {offsets = [4, 0], sizes = [1, 256], strides = [1, 1]} : vector<9x256xf32> to vector<1x256xf32>
    %34 = vector.broadcast %33 : vector<1x256xf32> to vector<8x256xf32>
    %35 = arith.mulf %11, %34 : vector<8x256xf32>
    %c32 = arith.constant 32 : index
    %c0_14 = arith.constant 0 : index
    %36 = vector.load %arg10[%c32, %c0_14] : memref<88x256xf32, #tpu.memory_space<vmem>>, vector<8x256xf32>
    tpu.vector_store %arg10[%c32, %c0_14], %35 {strides = array<i32>} : memref<88x256xf32, #tpu.memory_space<vmem>>, vector<8x256xf32>,
    %c255_i32 = arith.constant 255 : i32
    %37 = tpu.dynamic_rotate %11 by %c255_i32 dim 1 : vector<8x256xf32>, i32 -> vector<8x256xf32>
    %38 = vector.extract_strided_slice %12 {offsets = [5, 0], sizes = [1, 256], strides = [1, 1]} : vector<9x256xf32> to vector<1x256xf32>
    %39 = vector.broadcast %38 : vector<1x256xf32> to vector<8x256xf32>
    %40 = arith.mulf %37, %39 : vector<8x256xf32>
    %c40 = arith.constant 40 : index
    %c0_15 = arith.constant 0 : index
    %41 = vector.load %arg10[%c40, %c0_15] : memref<88x256xf32, #tpu.memory_space<vmem>>, vector<8x256xf32>
    tpu.vector_store %arg10[%c40, %c0_15], %40 {strides = array<i32>} : memref<88x256xf32, #tpu.memory_space<vmem>>, vector<8x256xf32>,
    %c241_i32 = arith.constant 241 : i32
    %42 = tpu.dynamic_rotate %11 by %c241_i32 dim 1 : vector<8x256xf32>, i32 -> vector<8x256xf32>
    %43 = vector.extract_strided_slice %12 {offsets = [6, 0], sizes = [1, 256], strides = [1, 1]} : vector<9x256xf32> to vector<1x256xf32>
    %44 = vector.broadcast %43 : vector<1x256xf32> to vector<8x256xf32>
    %45 = arith.mulf %42, %44 : vector<8x256xf32>
    %c48 = arith.constant 48 : index
    %c0_16 = arith.constant 0 : index
    %46 = vector.load %arg10[%c48, %c0_16] : memref<88x256xf32, #tpu.memory_space<vmem>>, vector<8x256xf32>
    tpu.vector_store %arg10[%c48, %c0_16], %45 {strides = array<i32>} : memref<88x256xf32, #tpu.memory_space<vmem>>, vector<8x256xf32>,
    %c240_i32 = arith.constant 240 : i32
    %47 = tpu.dynamic_rotate %11 by %c240_i32 dim 1 : vector<8x256xf32>, i32 -> vector<8x256xf32>
    %48 = vector.extract_strided_slice %12 {offsets = [7, 0], sizes = [1, 256], strides = [1, 1]} : vector<9x256xf32> to vector<1x256xf32>
    %49 = vector.broadcast %48 : vector<1x256xf32> to vector<8x256xf32>
    %50 = arith.mulf %47, %49 : vector<8x256xf32>
    %c56 = arith.constant 56 : index
    %c0_17 = arith.constant 0 : index
    %51 = vector.load %arg10[%c56, %c0_17] : memref<88x256xf32, #tpu.memory_space<vmem>>, vector<8x256xf32>
    tpu.vector_store %arg10[%c56, %c0_17], %50 {strides = array<i32>} : memref<88x256xf32, #tpu.memory_space<vmem>>, vector<8x256xf32>,
    %c239_i32 = arith.constant 239 : i32
    %52 = tpu.dynamic_rotate %11 by %c239_i32 dim 1 : vector<8x256xf32>, i32 -> vector<8x256xf32>
    %53 = vector.extract_strided_slice %12 {offsets = [8, 0], sizes = [1, 256], strides = [1, 1]} : vector<9x256xf32> to vector<1x256xf32>
    %54 = vector.broadcast %53 : vector<1x256xf32> to vector<8x256xf32>
    %55 = arith.mulf %52, %54 : vector<8x256xf32>
    %c64 = arith.constant 64 : index
    %c0_18 = arith.constant 0 : index
    %56 = vector.load %arg10[%c64, %c0_18] : memref<88x256xf32, #tpu.memory_space<vmem>>, vector<8x256xf32>
    tpu.vector_store %arg10[%c64, %c0_18], %55 {strides = array<i32>} : memref<88x256xf32, #tpu.memory_space<vmem>>, vector<8x256xf32>,
    %c0_19 = arith.constant 0 : index
    %c0_20 = arith.constant 0 : index
    %c0_21 = arith.constant 0 : index
    %57 = vector.load %arg2[%c0_19, %c0_20, %c0_21] : memref<1x8x256xf32, #tpu.memory_space<vmem>>, vector<1x8x256xf32>
    %58 = vector.shape_cast %57 : vector<1x8x256xf32> to vector<8x256xf32>
    %c0_22 = arith.constant 0 : index
    %c0_23 = arith.constant 0 : index
    %c0_24 = arith.constant 0 : index
    %59 = vector.load %arg3[%c0_22, %c0_23, %c0_24] : memref<1x4x256xf32, #tpu.memory_space<vmem>>, vector<1x4x256xf32>
    %60 = vector.shape_cast %59 : vector<1x4x256xf32> to vector<4x256xf32>
    %cst_25 = arith.constant 0.000000e+00 : f32
    %61 = vector.broadcast %cst_25 : f32 to vector<4x256xf32>
    %62 = tpu.concatenate %58, %60, %61 in 0 : vector<8x256xf32>, vector<4x256xf32>, vector<4x256xf32> -> vector<16x256xf32>
    %c72 = arith.constant 72 : index
    %c0_26 = arith.constant 0 : index
    %63 = vector.load %arg10[%c72, %c0_26] : memref<88x256xf32, #tpu.memory_space<vmem>>, vector<16x256xf32>
    tpu.vector_store %arg10[%c72, %c0_26], %62 {strides = array<i32>} : memref<88x256xf32, #tpu.memory_space<vmem>>, vector<16x256xf32>,
    %c0_27 = arith.constant 0 : index
    %c0_28 = arith.constant 0 : index
    %64 = vector.load %arg10[%c0_27, %c0_28] : memref<88x256xf32, #tpu.memory_space<vmem>>, vector<88x256xf32>
    %65 = arith.truncf %64 : vector<88x256xf32> to vector<88x256xbf16>
    %c0_29 = arith.constant 0 : index
    %c0_30 = arith.constant 0 : index
    %66 = vector.load %arg6[%c0_29, %c0_30] : memref<4x88xbf16, #tpu.memory_space<vmem>>, vector<4x88xbf16>
    %cst_31 = arith.constant dense<0.000000e+00> : vector<4x256xf32>
    %67 = tpu.matmul %66, %65, %cst_31 {dimension_numbers = #tpu.dot_dimension_numbers<[1], [0], [0], [1], [0, 0, 1, 1], [], []>} : vector<4x88xbf16>, vector<88x256xbf16>, vector<4x256xf32> -> vector<4x256xf32>
    %c0_32 = arith.constant 0 : index
    %c0_33 = arith.constant 0 : index
    %68 = vector.load %arg7[%c0_32, %c0_33] : memref<4x1xf32, #tpu.memory_space<vmem>>, vector<4x1xf32>
    %69 = vector.broadcast %68 : vector<4x1xf32> to vector<4x256xf32>
    %70 = arith.addf %67, %69 : vector<4x256xf32>
    %c0_34 = arith.constant 0 : index
    %c0_35 = arith.constant 0 : index
    %c0_36 = arith.constant 0 : index
    %71 = vector.load %arg9[%c0_34, %c0_35, %c0_36] : memref<1x4x256xf32, #tpu.memory_space<vmem>>, vector<1x4x256xf32>
    %72 = vector.shape_cast %71 : vector<1x4x256xf32> to vector<4x256xf32>
    %73 = vector.shape_cast %70 : vector<4x256xf32> to vector<1x4x256xf32>
    tpu.vector_store %arg9[%c0_34, %c0_35, %c0_36], %73 {strides = array<i32>} : memref<1x4x256xf32, #tpu.memory_space<vmem>>, vector<1x4x256xf32>,
    return
  }
  func.func @transform_0(%arg0: i32) -> (i32, i32, i32) {
    %c0_i32 = arith.constant 0 : i32
    %c0_i32_0 = arith.constant 0 : i32
    %c0_i32_1 = arith.constant 0 : i32
    return %arg0, %c0_i32, %c0_i32_0 : i32, i32, i32
  }
  func.func @transform_1(%arg0: i32) -> (i32, i32, i32) {
    %c0_i32 = arith.constant 0 : i32
    %c0_i32_0 = arith.constant 0 : i32
    %c0_i32_1 = arith.constant 0 : i32
    return %arg0, %c0_i32, %c0_i32_0 : i32, i32, i32
  }
  func.func @transform_2(%arg0: i32) -> (i32, i32, i32) {
    %c0_i32 = arith.constant 0 : i32
    %c0_i32_0 = arith.constant 0 : i32
    %c0_i32_1 = arith.constant 0 : i32
    return %arg0, %c0_i32, %c0_i32_0 : i32, i32, i32
  }
  func.func @transform_3(%arg0: i32) -> (i32, i32) {
    %c0_i32 = arith.constant 0 : i32
    %c0_i32_0 = arith.constant 0 : i32
    %c0_i32_1 = arith.constant 0 : i32
    return %c0_i32, %c0_i32_0 : i32, i32
  }
  func.func @transform_4(%arg0: i32) -> (i32, i32) {
    %c0_i32 = arith.constant 0 : i32
    %c0_i32_0 = arith.constant 0 : i32
    %c0_i32_1 = arith.constant 0 : i32
    return %c0_i32, %c0_i32_0 : i32, i32
  }
  func.func @transform_5(%arg0: i32) -> (i32, i32) {
    %c0_i32 = arith.constant 0 : i32
    %c0_i32_0 = arith.constant 0 : i32
    %c0_i32_1 = arith.constant 0 : i32
    return %c0_i32, %c0_i32_0 : i32, i32
  }
  func.func @transform_6(%arg0: i32) -> (i32, i32) {
    %c0_i32 = arith.constant 0 : i32
    %c0_i32_0 = arith.constant 0 : i32
    %c0_i32_1 = arith.constant 0 : i32
    return %c0_i32, %c0_i32_0 : i32, i32
  }
  func.func @transform_7(%arg0: i32) -> (i32, i32) {
    %c0_i32 = arith.constant 0 : i32
    %c0_i32_0 = arith.constant 0 : i32
    %c0_i32_1 = arith.constant 0 : i32
    return %c0_i32, %c0_i32_0 : i32, i32
  }
  func.func @transform_8(%arg0: i32) -> (i32, i32, i32) {
    %c0_i32 = arith.constant 0 : i32
    %c0_i32_0 = arith.constant 0 : i32
    %c0_i32_1 = arith.constant 0 : i32
    return %arg0, %c0_i32, %c0_i32_0 : i32, i32, i32
  }
}

</mosaic_0001>

<llo_original>
// kernel: decoder_block_forward.3
$region0: #{decoder_block_forward.3}
  #allocation0 [shape = 'u32[]', space=smem, size = 0x4, offset = 0x4, fixed_abs, tag = 'smem constant byte address 0x4 - core index']
  #allocation1 [shape = 'u32[144,128]{1,0:T(1,128)}', space=vmem, size = 0x12000, scoped, tag = 'internal scratch']
  %s0 = inlined_call_operand.vmem [shape: f32[2,8,256], index: 0, kind: input, shape index: {}]
  %s1 = inlined_call_operand.vmem [shape: f32[2,4,256], index: 1, kind: input, shape index: {}]
  %s2 = inlined_call_operand.vmem [shape: f32[8,1], index: 2, kind: output, shape index: {0}]
  %s3 = inlined_call_operand.vmem [shape: f32[8,1], index: 3, kind: output, shape index: {1}]
  %s4 = inlined_call_operand.vmem [shape: f32[4,1], index: 4, kind: output, shape index: {2}]
  %s5 = inlined_call_operand.vmem [shape: f32[4,1], index: 5, kind: output, shape index: {3}]
  %6 = xla_tuple %s2, %s3, %s4, %s5
  %s7 = sld [smem:[#allocation0]]
  $region69: #{decoder_block_forward.3} parent=0
    _
  %s9 = ssub.s32 1, %s7
  %s10 = scalar_select 0, %s9, %s7
  loop: start=0, step=1, limit=4
  $region2: #{decoder_block_forward.3} parent=0 // loop_pre_header
    _
  $region3: #{decoder_block_forward.3} parent=0 // loop_header
    %s12 = sphi 0, %s16
    %p13 = scmp.ge.s32.totalorder %s12, 4
    %s22 = sphi 0, %s24
    %s25 = sphi 0, %s22
    %s26 = sphi 0, %s25
    %s42 = sphi 0, %s26
    %s48 = sphi 0, %s50
    %s51 = sphi 0, %s48
    %s52 = sphi 0, %s51
    %s68 = sphi 0, %s52
    %s72 = sphi 0, %s72
    %s74 = sphi 0, %s72
    %s75 = sphi 0, %s74
    %s89 = sphi 0, %s75
    %s93 = sphi 0, %s93
    %s95 = sphi 0, %s93
    %s96 = sphi 0, %s95
    %s110 = sphi 0, %s96
    %s114 = sphi 0, %s114
    %s116 = sphi 0, %s114
    %s117 = sphi 0, %s116
    %s131 = sphi 0, %s117
    %s135 = sphi 0, %s135
    %s137 = sphi 0, %s135
    %s138 = sphi 0, %s137
    %s152 = sphi 0, %s138
  $region4: #{decoder_block_forward.3} parent=0 // loop_header_branch
    %15 = sbr.rel (%p13) target = $region8
  $region5: #{decoder_block_forward.3} parent=0 // loop_body
    %s17 = ssub.s32 %s12, 1
    %s18 = ssub.s32 %s12, 2
    %s19 = sadd.s32 %s12, 1
    %s20 = ssub.s32 %s12, %s19
    %p21 = scmp.eq.s32.totalorder %s20, 0
    %s23 = sadd.s32 %s22, 1
    %s24 = scalar_select %p21, %s22, %s23
    %p27 = pneg %p21
    %p28 = scmp.eq.s32.totalorder %s12, 1
    %p29 = por %p27, %p28
    %p30 = scmp.ne.s32.totalorder %s22, %s25
    %p31 = scmp.eq.s32.totalorder %s12, 0
    %p32 = por %p30, %p31
    %p33 = scmp.ne.s32.totalorder %s22, %s25
    %p34 = scmp.eq.s32.totalorder %s17, 1
    %p35 = por %p33, %p34
    %p36 = scmp.ne.s32.totalorder %s25, %s26
    %p37 = scmp.eq.s32.totalorder %s17, 0
    %p38 = por %p36, %p37
    %p39 = scmp.ne.s32.totalorder %s25, %s26
    %p40 = scmp.eq.s32.totalorder %s18, 1
    %p41 = por %p39, %p40
    %p43 = scmp.ne.s32.totalorder %s26, %s42
    %p44 = scmp.eq.s32.totalorder %s18, 0
    %p45 = por %p43, %p44
    %s46 = ssub.s32 %s12, %s19
    %p47 = scmp.eq.s32.totalorder %s46, 0
    %s49 = sadd.s32 %s48, 1
    %s50 = scalar_select %p47, %s48, %s49
    %p53 = pneg %p47
    %p54 = scmp.eq.s32.totalorder %s12, 1
    %p55 = por %p53, %p54
    %p56 = scmp.ne.s32.totalorder %s48, %s51
    %p57 = scmp.eq.s32.totalorder %s12, 0
    %p58 = por %p56, %p57
    %p59 = scmp.ne.s32.totalorder %s48, %s51
    %p60 = scmp.eq.s32.totalorder %s17, 1
    %p61 = por %p59, %p60
    %p62 = scmp.ne.s32.totalorder %s51, %s52
    %p63 = scmp.eq.s32.totalorder %s17, 0
    %p64 = por %p62, %p63
    %p65 = scmp.ne.s32.totalorder %s51, %s52
    %p66 = scmp.eq.s32.totalorder %s18, 1
    %p67 = por %p65, %p66
    %p69 = scmp.ne.s32.totalorder %s52, %s68
    %p70 = scmp.eq.s32.totalorder %s18, 0
    %p71 = por %p69, %p70
    %s73 = sadd.s32 %s72, 1
    %p76 = scmp.eq.s32.totalorder %s12, 1
    %p77 = scmp.ne.s32.totalorder %s72, %s74
    %p78 = scmp.eq.s32.totalorder %s12, 0
    %p79 = por %p77, %p78
    %p80 = scmp.ne.s32.totalorder %s72, %s74
    %p81 = scmp.eq.s32.totalorder %s17, 1
    %p82 = por %p80, %p81
    %p83 = scmp.ne.s32.totalorder %s74, %s75
    %p84 = scmp.eq.s32.totalorder %s17, 0
    %p85 = por %p83, %p84
    %p86 = scmp.ne.s32.totalorder %s74, %s75
    %p87 = scmp.eq.s32.totalorder %s18, 1
    %p88 = por %p86, %p87
    %p90 = scmp.ne.s32.totalorder %s75, %s89
    %p91 = scmp.eq.s32.totalorder %s18, 0
    %p92 = por %p90, %p91
    %s94 = sadd.s32 %s93, 1
    %p97 = scmp.eq.s32.totalorder %s12, 1
    %p98 = scmp.ne.s32.totalorder %s93, %s95
    %p99 = scmp.eq.s32.totalorder %s12, 0
    %p100 = por %p98, %p99
    %p101 = scmp.ne.s32.totalorder %s93, %s95
    %p102 = scmp.eq.s32.totalorder %s17, 1
    %p103 = por %p101, %p102
    %p104 = scmp.ne.s32.totalorder %s95, %s96
    %p105 = scmp.eq.s32.totalorder %s17, 0
    %p106 = por %p104, %p105
    %p107 = scmp.ne.s32.totalorder %s95, %s96
    %p108 = scmp.eq.s32.totalorder %s18, 1
    %p109 = por %p107, %p108
    %p111 = scmp.ne.s32.totalorder %s96, %s110
    %p112 = scmp.eq.s32.totalorder %s18, 0
    %p113 = por %p111, %p112
    %s115 = sadd.s32 %s114, 1
    %p118 = scmp.eq.s32.totalorder %s12, 1
    %p119 = scmp.ne.s32.totalorder %s114, %s116
    %p120 = scmp.eq.s32.totalorder %s12, 0
    %p121 = por %p119, %p120
    %p122 = scmp.ne.s32.totalorder %s114, %s116
    %p123 = scmp.eq.s32.totalorder %s17, 1
    %p124 = por %p122, %p123
    %p125 = scmp.ne.s32.totalorder %s116, %s117
    %p126 = scmp.eq.s32.totalorder %s17, 0
    %p127 = por %p125, %p126
    %p128 = scmp.ne.s32.totalorder %s116, %s117
    %p129 = scmp.eq.s32.totalorder %s18, 1
    %p130 = por %p128, %p129
    %p132 = scmp.ne.s32.totalorder %s117, %s131
    %p133 = scmp.eq.s32.totalorder %s18, 0
    %p134 = por %p132, %p133
    %s136 = sadd.s32 %s135, 1
    %p139 = scmp.eq.s32.totalorder %s12, 1
    %p140 = scmp.ne.s32.totalorder %s135, %s137
    %p141 = scmp.eq.s32.totalorder %s12, 0
    %p142 = por %p140, %p141
    %p143 = scmp.ne.s32.totalorder %s135, %s137
    %p144 = scmp.eq.s32.totalorder %s17, 1
    %p145 = por %p143, %p144
    %p146 = scmp.ne.s32.totalorder %s137, %s138
    %p147 = scmp.eq.s32.totalorder %s17, 0
    %p148 = por %p146, %p147
    %p149 = scmp.ne.s32.totalorder %s137, %s138
    %p150 = scmp.eq.s32.totalorder %s18, 1
    %p151 = por %p149, %p150
    %p153 = scmp.ne.s32.totalorder %s138, %s152
    %p154 = scmp.eq.s32.totalorder %s18, 0
    %p155 = por %p153, %p154
    %p156 = scmp.le.s32.totalorder 1, %s12
    %p157 = scmp.lt.s32.totalorder %s12, 3
    %p158 = pnand %p156, %p157
    %p159 = pneg %p158
    // Predicated region
    $region9: #{decoder_block_forward.3} parent=5 // pred_check
      _
    $region10: #{decoder_block_forward.3} parent=5 // pred_check_branch
      %161 = sbr.rel (%p158) target = $region12
    $region11: #{decoder_block_forward.3} parent=5 // pred_region
      %s162 = ssub.s32 %s12, 1
    $region12: #{decoder_block_forward.3} parent=5 // pred_fallthru
      _
    %p163 = scmp.lt.s32.totalorder %s12, 2
    // Predicated region
    $region13: #{decoder_block_forward.3} parent=5 // pred_check
      %p164 = pneg %p163
    $region14: #{decoder_block_forward.3} parent=5 // pred_check_branch
      %166 = sbr.rel (%p164) target = $region16
    $region15: #{decoder_block_forward.3} parent=5 // pred_region
      // Predicated region
      $region17: #{decoder_block_forward.3} parent=15 // pred_check
        %p167 = pneg %p32
      $region18: #{decoder_block_forward.3} parent=15 // pred_check_branch
        %169 = sbr.rel (%p167) target = $region20
      $region19: #{decoder_block_forward.3} parent=15 // pred_region
        %p170 = scmp.lt.s32.totalorder %s12, 1
        %s171 = scalar_select %p170, %s12, 1
        %s172 = smul.addr %s171, 2
        %s173 = smul.addr %s172, 8
        %s174 = scalar_lea.vmem %s0, %s173
      $region20: #{decoder_block_forward.3} parent=15 // pred_fallthru
        _
      // Predicated region
      $region21: #{decoder_block_forward.3} parent=15 // pred_check
        %p175 = pneg %p58
      $region22: #{decoder_block_forward.3} parent=15 // pred_check_branch
        %177 = sbr.rel (%p175) target = $region24
      $region23: #{decoder_block_forward.3} parent=15 // pred_region
        %p178 = scmp.lt.s32.totalorder %s12, 1
        %s179 = scalar_select %p178, %s12, 1
        %s180 = smul.addr %s179, 2
        %s181 = smul.addr %s180, 4
        %s182 = scalar_lea.vmem %s1, %s181
      $region24: #{decoder_block_forward.3} parent=15 // pred_fallthru
        _
    $region16: #{decoder_block_forward.3} parent=5 // pred_fallthru
      _
    %p183 = scmp.le.s32.totalorder 1, %s12
    %p184 = scmp.lt.s32.totalorder %s12, 3
    %p185 = pnand %p183, %p184
    %p186 = pneg %p185
    // Predicated region
    $region25: #{decoder_block_forward.3} parent=5 // pred_check
      _
    $region26: #{decoder_block_forward.3} parent=5 // pred_check_branch
      %188 = sbr.rel (%p185) target = $region28
    $region27: #{decoder_block_forward.3} parent=5 // pred_region
      %s189 = ssub.s32 %s12, 1
      %p190 = scmp.lt.s32.totalorder %s17, 1
      %s191 = scalar_select %p190, %s17, 1
      %s192 = smul.addr %s191, 2
      %s193 = smul.addr %s192, 8
      %s194 = scalar_lea.vmem %s0, %s193
      %p195 = pneg %p38
      %p196 = pneg %p35
      %p197 = scmp.lt.s32.totalorder %s17, 1
      %s198 = scalar_select %p197, %s17, 1
      %s199 = smul.addr %s198, 2
      %s200 = smul.addr %s199, 4
      %s201 = scalar_lea.vmem %s1, %s200
      %p202 = pneg %p64
      %p203 = pneg %p61
      %p204 = pneg %p85
      %p205 = pneg %p82
      %p206 = pneg %p106
      %p207 = pneg %p103
      %p208 = pneg %p127
      %p209 = pneg %p124
      %p210 = pneg %p148
      %p211 = pneg %p145
      %p212 = scmp.lt.s32.totalorder %s17, 1
      %s213 = scalar_select %p212, %s17, 1
      %s214 = smul.addr %s213, 2
      %s215 = smul.addr %s214, 8
      %s216 = scalar_lea.vmem %s0, %s215
      %p217 = scmp.lt.s32.totalorder %s17, 1
      %s218 = scalar_select %p217, %s17, 1
      %s219 = smul.addr %s218, 2
      %s220 = smul.addr %s219, 4
      %s221 = scalar_lea.vmem %s1, %s220
      %p222 = scmp.eq.s32.totalorder %s17, 0
      // Predicated region
      $region29: #{decoder_block_forward.3} parent=27 // pred_check
        %p223 = pneg %p222
      $region30: #{decoder_block_forward.3} parent=27 // pred_check_branch
        %225 = sbr.rel (%p223) target = $region32
      $region31: #{decoder_block_forward.3} parent=27 // pred_region
        %vm226 = vcmask 7168
        %227 = vst.msk [vmem:[%s2] sm:$0xff] %vm226, 0.0
        %228 = vst.msk [vmem:[%s3] sm:$0xff] %vm226, 0.0
        %vm229 = vcmask 3072
        %230 = vst.msk [vmem:[%s4] sm:$0xf] %vm229, 0.0
        %231 = vst.msk [vmem:[%s5] sm:$0xf] %vm229, 0.0
      $region32: #{decoder_block_forward.3} parent=27 // pred_fallthru
        _
      %v232 = vld [vmem:[%s216] sm:$0xff]
      %v233 = vld [vmem:[%s216 + $0x8] sm:$0xff]
      %v234 = vld [vmem:[%s221] sm:$0xff]
      %v235 = vld [vmem:[%s2] sm:$0xff]
      %v236 = vadd.f32 %v232, %v233
      %237 = vadd.xlane.f32.xlu0 %v236
      %v238 = vpop.xlane.xlu0 %237
      %v239 = vadd.f32 %v235, %v238
      %vm240 = vcmask 7168
      %241 = vst.msk [vmem:[%s2] sm:$0xff] %vm240, %v239
      %v242 = vld [vmem:[%s3] sm:$0xff]
      %v243 = vmul.f32 %v232, %v232
      %v244 = vmul.f32 %v233, %v233
      %v245 = vadd.f32 %v243, %v244
      %246 = vadd.xlane.f32.xlu0 %v245
      %v247 = vpop.xlane.xlu0 %246
      %v248 = vadd.f32 %v242, %v247
      %249 = vst.msk [vmem:[%s3] sm:$0xff] %vm240, %v248
      %v250 = vld [vmem:[%s4] sm:$0xf]
      %v252 = vcombine.high %v234, %v234
      %vm254 = vcmask 1043456
      %v255 = vsel %vm254, %v234, 0.0
      %v256 = vsel %vm254, %v252, 0.0
      %v257 = vadd.f32 %v255, %v256
      %258 = vadd.xlane.f32.xlu0 %v257
      %v259 = vpop.xlane.xlu0 %258
      %v260 = vadd.f32 %v250, %v259
      %vm261 = vcmask 3072
      %262 = vst.msk [vmem:[%s4] sm:$0xf] %vm261, %v260
      %v263 = vld [vmem:[%s5] sm:$0xf]
      %v264 = vmul.f32 %v234, %v234
      %v266 = vcombine.high %v264, %v264
      %v268 = vsel %vm254, %v264, 0.0
      %v269 = vsel %vm254, %v266, 0.0
      %v270 = vadd.f32 %v268, %v269
      %271 = vadd.xlane.f32.xlu0 %v270
      %v272 = vpop.xlane.xlu0 %271
      %v273 = vadd.f32 %v263, %v272
      %274 = vst.msk [vmem:[%s5] sm:$0xf] %vm261, %v273
      // Predicated region
      $region33: #{decoder_block_forward.3} parent=27 // pred_check
        %p275 = pneg %p82
      $region34: #{decoder_block_forward.3} parent=27 // pred_check_branch
        %277 = sbr.rel (%p275) target = $region36
      $region35: #{decoder_block_forward.3} parent=27 // pred_region
        _
      $region36: #{decoder_block_forward.3} parent=27 // pred_fallthru
        _
      // Predicated region
      $region37: #{decoder_block_forward.3} parent=27 // pred_check
        %p278 = pneg %p103
      $region38: #{decoder_block_forward.3} parent=27 // pred_check_branch
        %280 = sbr.rel (%p278) target = $region40
      $region39: #{decoder_block_forward.3} parent=27 // pred_region
        _
      $region40: #{decoder_block_forward.3} parent=27 // pred_fallthru
        _
      // Predicated region
      $region41: #{decoder_block_forward.3} parent=27 // pred_check
        %p281 = pneg %p124
      $region42: #{decoder_block_forward.3} parent=27 // pred_check_branch
        %283 = sbr.rel (%p281) target = $region44
      $region43: #{decoder_block_forward.3} parent=27 // pred_region
        _
      $region44: #{decoder_block_forward.3} parent=27 // pred_fallthru
        _
      // Predicated region
      $region45: #{decoder_block_forward.3} parent=27 // pred_check
        %p284 = pneg %p145
      $region46: #{decoder_block_forward.3} parent=27 // pred_check_branch
        %286 = sbr.rel (%p284) target = $region48
      $region47: #{decoder_block_forward.3} parent=27 // pred_region
        _
      $region48: #{decoder_block_forward.3} parent=27 // pred_fallthru
        _
      // Predicated region
      $region49: #{decoder_block_forward.3} parent=27 // pred_check
        %p287 = pneg %p82
      $region50: #{decoder_block_forward.3} parent=27 // pred_check_branch
        %289 = sbr.rel (%p287) target = $region52
      $region51: #{decoder_block_forward.3} parent=27 // pred_region
        _
      $region52: #{decoder_block_forward.3} parent=27 // pred_fallthru
        _
      // Predicated region
      $region53: #{decoder_block_forward.3} parent=27 // pred_check
        %p290 = pneg %p103
      $region54: #{decoder_block_forward.3} parent=27 // pred_check_branch
        %292 = sbr.rel (%p290) target = $region56
      $region55: #{decoder_block_forward.3} parent=27 // pred_region
        _
      $region56: #{decoder_block_forward.3} parent=27 // pred_fallthru
        _
      // Predicated region
      $region57: #{decoder_block_forward.3} parent=27 // pred_check
        %p293 = pneg %p124
      $region58: #{decoder_block_forward.3} parent=27 // pred_check_branch
        %295 = sbr.rel (%p293) target = $region60
      $region59: #{decoder_block_forward.3} parent=27 // pred_region
        _
      $region60: #{decoder_block_forward.3} parent=27 // pred_fallthru
        _
      // Predicated region
      $region61: #{decoder_block_forward.3} parent=27 // pred_check
        %p296 = pneg %p145
      $region62: #{decoder_block_forward.3} parent=27 // pred_check_branch
        %298 = sbr.rel (%p296) target = $region64
      $region63: #{decoder_block_forward.3} parent=27 // pred_region
        _
      $region64: #{decoder_block_forward.3} parent=27 // pred_fallthru
        _
    $region28: #{decoder_block_forward.3} parent=5 // pred_fallthru
      _
    %p299 = scmp.le.s32.totalorder 2, %s12
    // Predicated region
    $region65: #{decoder_block_forward.3} parent=5 // pred_check
      %p300 = pneg %p299
    $region66: #{decoder_block_forward.3} parent=5 // pred_check_branch
      %302 = sbr.rel (%p300) target = $region68
    $region67: #{decoder_block_forward.3} parent=5 // pred_region
      %s303 = ssub.s32 %s12, 2
    $region68: #{decoder_block_forward.3} parent=5 // pred_fallthru
      _
  $region6: #{decoder_block_forward.3} parent=0 // loop_footer
    %s16 = sadd.s32 1, %s12
  $region7: #{decoder_block_forward.3} parent=0 // loop_footer_branch
    %11 = sbr.rel target = $region3
  $region8: #{decoder_block_forward.3} parent=0 // loop_exit
    _

// kernel: decoder_block_forward.4
$region0: #{decoder_block_forward.4}
  #allocation0 [shape = 'u32[]', space=smem, size = 0x4, offset = 0x4, fixed_abs, tag = 'smem constant byte address 0x4 - core index']
  #allocation1 [shape = 'u32[144,128]{1,0:T(1,128)}', space=vmem, size = 0x12000, scoped, tag = 'internal scratch']
  #allocation2 [shape = 'f32[144,256]{1,0:T(8,128)}', space=vmem, size = 0x24000, scoped, tag = 'scratch operand']
  %s0 = inlined_call_operand.vmem [shape: f32[2,8,256], index: 0, kind: input, shape index: {}]
  %s1 = inlined_call_operand.vmem [shape: f32[2,4,256], index: 1, kind: input, shape index: {}]
  %s2 = inlined_call_operand.vmem [shape: f32[8,1], index: 2, kind: input, shape index: {}]
  %s3 = inlined_call_operand.vmem [shape: f32[8,1], index: 3, kind: input, shape index: {}]
  %s4 = inlined_call_operand.vmem [shape: f32[4,1], index: 4, kind: input, shape index: {}]
  %s5 = inlined_call_operand.vmem [shape: f32[4,1], index: 5, kind: input, shape index: {}]
  %s6 = inlined_call_operand.vmem [shape: bf16[4,144], index: 6, kind: input, shape index: {}]
  %s7 = inlined_call_operand.vmem [shape: f32[4,1], index: 7, kind: input, shape index: {}]
  %s8 = inlined_call_operand.vmem [shape: f32[9,256], index: 8, kind: input, shape index: {}]
  %s9 = inlined_call_operand.vmem [shape: f32[2,4,256], index: 9, kind: output, shape index: {0}]
  %s10 = inlined_call_operand.vmem [shape: f32[4,1], index: 10, kind: output, shape index: {1}]
  %s11 = inlined_call_operand.vmem [shape: f32[4,1], index: 11, kind: output, shape index: {2}]
  %12 = xla_tuple %s9, %s10, %s11
  %s13 = sld [smem:[#allocation0]]
  $region89: #{decoder_block_forward.4} parent=0
    _
  %s15 = ssub.s32 1, %s13
  %s16 = scalar_select 0, %s15, %s13
  loop: start=0, step=1, limit=4
  $region2: #{decoder_block_forward.4} parent=0 // loop_pre_header
    _
  $region3: #{decoder_block_forward.4} parent=0 // loop_header
    %s18 = sphi 0, %s22
    %p19 = scmp.ge.s32.totalorder %s18, 4
    %s28 = sphi 0, %s30
    %s31 = sphi 0, %s28
    %s32 = sphi 0, %s31
    %s48 = sphi 0, %s32
    %s54 = sphi 0, %s56
    %s57 = sphi 0, %s54
    %s58 = sphi 0, %s57
    %s74 = sphi 0, %s58
    %s78 = sphi 0, %s78
    %s80 = sphi 0, %s78
    %s81 = sphi 0, %s80
    %s95 = sphi 0, %s81
    %s99 = sphi 0, %s99
    %s101 = sphi 0, %s99
    %s102 = sphi 0, %s101
    %s116 = sphi 0, %s102
    %s120 = sphi 0, %s120
    %s122 = sphi 0, %s120
    %s123 = sphi 0, %s122
    %s137 = sphi 0, %s123
    %s141 = sphi 0, %s141
    %s143 = sphi 0, %s141
    %s144 = sphi 0, %s143
    %s158 = sphi 0, %s144
    %s162 = sphi 0, %s162
    %s164 = sphi 0, %s162
    %s165 = sphi 0, %s164
    %s179 = sphi 0, %s165
    %s183 = sphi 0, %s183
    %s185 = sphi 0, %s183
    %s186 = sphi 0, %s185
    %s200 = sphi 0, %s186
    %s204 = sphi 0, %s204
    %s206 = sphi 0, %s204
    %s207 = sphi 0, %s206
    %s221 = sphi 0, %s207
    %s227 = sphi 0, %s229
    %s230 = sphi 0, %s227
    %s231 = sphi 0, %s230
    %s247 = sphi 0, %s231
    %s251 = sphi 0, %s251
    %s253 = sphi 0, %s251
    %s254 = sphi 0, %s253
    %s268 = sphi 0, %s254
    %s272 = sphi 0, %s272
    %s274 = sphi 0, %s272
    %s275 = sphi 0, %s274
    %s289 = sphi 0, %s275
  $region4: #{decoder_block_forward.4} parent=0 // loop_header_branch
    %21 = sbr.rel (%p19) target = $region8
  $region5: #{decoder_block_forward.4} parent=0 // loop_body
    %s23 = ssub.s32 %s18, 1
    %s24 = ssub.s32 %s18, 2
    %s25 = sadd.s32 %s18, 1
    %s26 = ssub.s32 %s18, %s25
    %p27 = scmp.eq.s32.totalorder %s26, 0
    %s29 = sadd.s32 %s28, 1
    %s30 = scalar_select %p27, %s28, %s29
    %p33 = pneg %p27
    %p34 = scmp.eq.s32.totalorder %s18, 1
    %p35 = por %p33, %p34
    %p36 = scmp.ne.s32.totalorder %s28, %s31
    %p37 = scmp.eq.s32.totalorder %s18, 0
    %p38 = por %p36, %p37
    %p39 = scmp.ne.s32.totalorder %s28, %s31
    %p40 = scmp.eq.s32.totalorder %s23, 1
    %p41 = por %p39, %p40
    %p42 = scmp.ne.s32.totalorder %s31, %s32
    %p43 = scmp.eq.s32.totalorder %s23, 0
    %p44 = por %p42, %p43
    %p45 = scmp.ne.s32.totalorder %s31, %s32
    %p46 = scmp.eq.s32.totalorder %s24, 1
    %p47 = por %p45, %p46
    %p49 = scmp.ne.s32.totalorder %s32, %s48
    %p50 = scmp.eq.s32.totalorder %s24, 0
    %p51 = por %p49, %p50
    %s52 = ssub.s32 %s18, %s25
    %p53 = scmp.eq.s32.totalorder %s52, 0
    %s55 = sadd.s32 %s54, 1
    %s56 = scalar_select %p53, %s54, %s55
    %p59 = pneg %p53
    %p60 = scmp.eq.s32.totalorder %s18, 1
    %p61 = por %p59, %p60
    %p62 = scmp.ne.s32.totalorder %s54, %s57
    %p63 = scmp.eq.s32.totalorder %s18, 0
    %p64 = por %p62, %p63
    %p65 = scmp.ne.s32.totalorder %s54, %s57
    %p66 = scmp.eq.s32.totalorder %s23, 1
    %p67 = por %p65, %p66
    %p68 = scmp.ne.s32.totalorder %s57, %s58
    %p69 = scmp.eq.s32.totalorder %s23, 0
    %p70 = por %p68, %p69
    %p71 = scmp.ne.s32.totalorder %s57, %s58
    %p72 = scmp.eq.s32.totalorder %s24, 1
    %p73 = por %p71, %p72
    %p75 = scmp.ne.s32.totalorder %s58, %s74
    %p76 = scmp.eq.s32.totalorder %s24, 0
    %p77 = por %p75, %p76
    %s79 = sadd.s32 %s78, 1
    %p82 = scmp.eq.s32.totalorder %s18, 1
    %p83 = scmp.ne.s32.totalorder %s78, %s80
    %p84 = scmp.eq.s32.totalorder %s18, 0
    %p85 = por %p83, %p84
    %p86 = scmp.ne.s32.totalorder %s78, %s80
    %p87 = scmp.eq.s32.totalorder %s23, 1
    %p88 = por %p86, %p87
    %p89 = scmp.ne.s32.totalorder %s80, %s81
    %p90 = scmp.eq.s32.totalorder %s23, 0
    %p91 = por %p89, %p90
    %p92 = scmp.ne.s32.totalorder %s80, %s81
    %p93 = scmp.eq.s32.totalorder %s24, 1
    %p94 = por %p92, %p93
    %p96 = scmp.ne.s32.totalorder %s81, %s95
    %p97 = scmp.eq.s32.totalorder %s24, 0
    %p98 = por %p96, %p97
    %s100 = sadd.s32 %s99, 1
    %p103 = scmp.eq.s32.totalorder %s18, 1
    %p104 = scmp.ne.s32.totalorder %s99, %s101
    %p105 = scmp.eq.s32.totalorder %s18, 0
    %p106 = por %p104, %p105
    %p107 = scmp.ne.s32.totalorder %s99, %s101
    %p108 = scmp.eq.s32.totalorder %s23, 1
    %p109 = por %p107, %p108
    %p110 = scmp.ne.s32.totalorder %s101, %s102
    %p111 = scmp.eq.s32.totalorder %s23, 0
    %p112 = por %p110, %p111
    %p113 = scmp.ne.s32.totalorder %s101, %s102
    %p114 = scmp.eq.s32.totalorder %s24, 1
    %p115 = por %p113, %p114
    %p117 = scmp.ne.s32.totalorder %s102, %s116
    %p118 = scmp.eq.s32.totalorder %s24, 0
    %p119 = por %p117, %p118
    %s121 = sadd.s32 %s120, 1
    %p124 = scmp.eq.s32.totalorder %s18, 1
    %p125 = scmp.ne.s32.totalorder %s120, %s122
    %p126 = scmp.eq.s32.totalorder %s18, 0
    %p127 = por %p125, %p126
    %p128 = scmp.ne.s32.totalorder %s120, %s122
    %p129 = scmp.eq.s32.totalorder %s23, 1
    %p130 = por %p128, %p129
    %p131 = scmp.ne.s32.totalorder %s122, %s123
    %p132 = scmp.eq.s32.totalorder %s23, 0
    %p133 = por %p131, %p132
    %p134 = scmp.ne.s32.totalorder %s122, %s123
    %p135 = scmp.eq.s32.totalorder %s24, 1
    %p136 = por %p134, %p135
    %p138 = scmp.ne.s32.totalorder %s123, %s137
    %p139 = scmp.eq.s32.totalorder %s24, 0
    %p140 = por %p138, %p139
    %s142 = sadd.s32 %s141, 1
    %p145 = scmp.eq.s32.totalorder %s18, 1
    %p146 = scmp.ne.s32.totalorder %s141, %s143
    %p147 = scmp.eq.s32.totalorder %s18, 0
    %p148 = por %p146, %p147
    %p149 = scmp.ne.s32.totalorder %s141, %s143
    %p150 = scmp.eq.s32.totalorder %s23, 1
    %p151 = por %p149, %p150
    %p152 = scmp.ne.s32.totalorder %s143, %s144
    %p153 = scmp.eq.s32.totalorder %s23, 0
    %p154 = por %p152, %p153
    %p155 = scmp.ne.s32.totalorder %s143, %s144
    %p156 = scmp.eq.s32.totalorder %s24, 1
    %p157 = por %p155, %p156
    %p159 = scmp.ne.s32.totalorder %s144, %s158
    %p160 = scmp.eq.s32.totalorder %s24, 0
    %p161 = por %p159, %p160
    %s163 = sadd.s32 %s162, 1
    %p166 = scmp.eq.s32.totalorder %s18, 1
    %p167 = scmp.ne.s32.totalorder %s162, %s164
    %p168 = scmp.eq.s32.totalorder %s18, 0
    %p169 = por %p167, %p168
    %p170 = scmp.ne.s32.totalorder %s162, %s164
    %p171 = scmp.eq.s32.totalorder %s23, 1
    %p172 = por %p170, %p171
    %p173 = scmp.ne.s32.totalorder %s164, %s165
    %p174 = scmp.eq.s32.totalorder %s23, 0
    %p175 = por %p173, %p174
    %p176 = scmp.ne.s32.totalorder %s164, %s165
    %p177 = scmp.eq.s32.totalorder %s24, 1
    %p178 = por %p176, %p177
    %p180 = scmp.ne.s32.totalorder %s165, %s179
    %p181 = scmp.eq.s32.totalorder %s24, 0
    %p182 = por %p180, %p181
    %s184 = sadd.s32 %s183, 1
    %p187 = scmp.eq.s32.totalorder %s18, 1
    %p188 = scmp.ne.s32.totalorder %s183, %s185
    %p189 = scmp.eq.s32.totalorder %s18, 0
    %p190 = por %p188, %p189
    %p191 = scmp.ne.s32.totalorder %s183, %s185
    %p192 = scmp.eq.s32.totalorder %s23, 1
    %p193 = por %p191, %p192
    %p194 = scmp.ne.s32.totalorder %s185, %s186
    %p195 = scmp.eq.s32.totalorder %s23, 0
    %p196 = por %p194, %p195
    %p197 = scmp.ne.s32.totalorder %s185, %s186
    %p198 = scmp.eq.s32.totalorder %s24, 1
    %p199 = por %p197, %p198
    %p201 = scmp.ne.s32.totalorder %s186, %s200
    %p202 = scmp.eq.s32.totalorder %s24, 0
    %p203 = por %p201, %p202
    %s205 = sadd.s32 %s204, 1
    %p208 = scmp.eq.s32.totalorder %s18, 1
    %p209 = scmp.ne.s32.totalorder %s204, %s206
    %p210 = scmp.eq.s32.totalorder %s18, 0
    %p211 = por %p209, %p210
    %p212 = scmp.ne.s32.totalorder %s204, %s206
    %p213 = scmp.eq.s32.totalorder %s23, 1
    %p214 = por %p212, %p213
    %p215 = scmp.ne.s32.totalorder %s206, %s207
    %p216 = scmp.eq.s32.totalorder %s23, 0
    %p217 = por %p215, %p216
    %p218 = scmp.ne.s32.totalorder %s206, %s207
    %p219 = scmp.eq.s32.totalorder %s24, 1
    %p220 = por %p218, %p219
    %p222 = scmp.ne.s32.totalorder %s207, %s221
    %p223 = scmp.eq.s32.totalorder %s24, 0
    %p224 = por %p222, %p223
    %s225 = ssub.s32 %s18, %s25
    %p226 = scmp.eq.s32.totalorder %s225, 0
    %s228 = sadd.s32 %s227, 1
    %s229 = scalar_select %p226, %s227, %s228
    %p232 = pneg %p226
    %p233 = scmp.eq.s32.totalorder %s18, 1
    %p234 = por %p232, %p233
    %p235 = scmp.ne.s32.totalorder %s227, %s230
    %p236 = scmp.eq.s32.totalorder %s18, 0
    %p237 = por %p235, %p236
    %p238 = scmp.ne.s32.totalorder %s227, %s230
    %p239 = scmp.eq.s32.totalorder %s23, 1
    %p240 = por %p238, %p239
    %p241 = scmp.ne.s32.totalorder %s230, %s231
    %p242 = scmp.eq.s32.totalorder %s23, 0
    %p243 = por %p241, %p242
    %p244 = scmp.ne.s32.totalorder %s230, %s231
    %p245 = scmp.eq.s32.totalorder %s24, 1
    %p246 = por %p244, %p245
    %p248 = scmp.ne.s32.totalorder %s231, %s247
    %p249 = scmp.eq.s32.totalorder %s24, 0
    %p250 = por %p248, %p249
    %s252 = sadd.s32 %s251, 1
    %p255 = scmp.eq.s32.totalorder %s18, 1
    %p256 = scmp.ne.s32.totalorder %s251, %s253
    %p257 = scmp.eq.s32.totalorder %s18, 0
    %p258 = por %p256, %p257
    %p259 = scmp.ne.s32.totalorder %s251, %s253
    %p260 = scmp.eq.s32.totalorder %s23, 1
    %p261 = por %p259, %p260
    %p262 = scmp.ne.s32.totalorder %s253, %s254
    %p263 = scmp.eq.s32.totalorder %s23, 0
    %p264 = por %p262, %p263
    %p265 = scmp.ne.s32.totalorder %s253, %s254
    %p266 = scmp.eq.s32.totalorder %s24, 1
    %p267 = por %p265, %p266
    %p269 = scmp.ne.s32.totalorder %s254, %s268
    %p270 = scmp.eq.s32.totalorder %s24, 0
    %p271 = por %p269, %p270
    %s273 = sadd.s32 %s272, 1
    %p276 = scmp.eq.s32.totalorder %s18, 1
    %p277 = scmp.ne.s32.totalorder %s272, %s274
    %p278 = scmp.eq.s32.totalorder %s18, 0
    %p279 = por %p277, %p278
    %p280 = scmp.ne.s32.totalorder %s272, %s274
    %p281 = scmp.eq.s32.totalorder %s23, 1
    %p282 = por %p280, %p281
    %p283 = scmp.ne.s32.totalorder %s274, %s275
    %p284 = scmp.eq.s32.totalorder %s23, 0
    %p285 = por %p283, %p284
    %p286 = scmp.ne.s32.totalorder %s274, %s275
    %p287 = scmp.eq.s32.totalorder %s24, 1
    %p288 = por %p286, %p287
    %p290 = scmp.ne.s32.totalorder %s275, %s289
    %p291 = scmp.eq.s32.totalorder %s24, 0
    %p292 = por %p290, %p291
    %p293 = scmp.le.s32.totalorder 1, %s18
    %p294 = scmp.lt.s32.totalorder %s18, 3
    %p295 = pnand %p293, %p294
    %p296 = pneg %p295
    // Predicated region
    $region9: #{decoder_block_forward.4} parent=5 // pred_check
      _
    $region10: #{decoder_block_forward.4} parent=5 // pred_check_branch
      %298 = sbr.rel (%p295) target = $region12
    $region11: #{decoder_block_forward.4} parent=5 // pred_region
      %s299 = ssub.s32 %s18, 1
      // Predicated region
      $region13: #{decoder_block_forward.4} parent=11 // pred_check
        %p300 = pneg %p91
      $region14: #{decoder_block_forward.4} parent=11 // pred_check_branch
        %302 = sbr.rel (%p300) target = $region16
      $region15: #{decoder_block_forward.4} parent=11 // pred_region
        _
      $region16: #{decoder_block_forward.4} parent=11 // pred_fallthru
        _
      // Predicated region
      $region17: #{decoder_block_forward.4} parent=11 // pred_check
        %p303 = pneg %p112
      $region18: #{decoder_block_forward.4} parent=11 // pred_check_branch
        %305 = sbr.rel (%p303) target = $region20
      $region19: #{decoder_block_forward.4} parent=11 // pred_region
        _
      $region20: #{decoder_block_forward.4} parent=11 // pred_fallthru
        _
      // Predicated region
      $region21: #{decoder_block_forward.4} parent=11 // pred_check
        %p306 = pneg %p133
      $region22: #{decoder_block_forward.4} parent=11 // pred_check_branch
        %308 = sbr.rel (%p306) target = $region24
      $region23: #{decoder_block_forward.4} parent=11 // pred_region
        _
      $region24: #{decoder_block_forward.4} parent=11 // pred_fallthru
        _
      // Predicated region
      $region25: #{decoder_block_forward.4} parent=11 // pred_check
        %p309 = pneg %p154
      $region26: #{decoder_block_forward.4} parent=11 // pred_check_branch
        %311 = sbr.rel (%p309) target = $region28
      $region27: #{decoder_block_forward.4} parent=11 // pred_region
        _
      $region28: #{decoder_block_forward.4} parent=11 // pred_fallthru
        _
      // Predicated region
      $region29: #{decoder_block_forward.4} parent=11 // pred_check
        %p312 = pneg %p175
      $region30: #{decoder_block_forward.4} parent=11 // pred_check_branch
        %314 = sbr.rel (%p312) target = $region32
      $region31: #{decoder_block_forward.4} parent=11 // pred_region
        _
      $region32: #{decoder_block_forward.4} parent=11 // pred_fallthru
        _
      // Predicated region
      $region33: #{decoder_block_forward.4} parent=11 // pred_check
        %p315 = pneg %p196
      $region34: #{decoder_block_forward.4} parent=11 // pred_check_branch
        %317 = sbr.rel (%p315) target = $region36
      $region35: #{decoder_block_forward.4} parent=11 // pred_region
        _
      $region36: #{decoder_block_forward.4} parent=11 // pred_fallthru
        _
      // Predicated region
      $region37: #{decoder_block_forward.4} parent=11 // pred_check
        %p318 = pneg %p217
      $region38: #{decoder_block_forward.4} parent=11 // pred_check_branch
        %320 = sbr.rel (%p318) target = $region40
      $region39: #{decoder_block_forward.4} parent=11 // pred_region
        _
      $region40: #{decoder_block_forward.4} parent=11 // pred_fallthru
        _
    $region12: #{decoder_block_forward.4} parent=5 // pred_fallthru
      _
    %p321 = scmp.lt.s32.totalorder %s18, 2
    // Predicated region
    $region41: #{decoder_block_forward.4} parent=5 // pred_check
      %p322 = pneg %p321
    $region42: #{decoder_block_forward.4} parent=5 // pred_check_branch
      %324 = sbr.rel (%p322) target = $region44
    $region43: #{decoder_block_forward.4} parent=5 // pred_region
      // Predicated region
      $region45: #{decoder_block_forward.4} parent=43 // pred_check
        %p325 = pneg %p38
      $region46: #{decoder_block_forward.4} parent=43 // pred_check_branch
        %327 = sbr.rel (%p325) target = $region48
      $region47: #{decoder_block_forward.4} parent=43 // pred_region
        %p328 = scmp.lt.s32.totalorder %s18, 1
        %s329 = scalar_select %p328, %s18, 1
        %s330 = smul.addr %s329, 2
        %s331 = smul.addr %s330, 8
        %s332 = scalar_lea.vmem %s0, %s331
      $region48: #{decoder_block_forward.4} parent=43 // pred_fallthru
        _
      // Predicated region
      $region49: #{decoder_block_forward.4} parent=43 // pred_check
        %p333 = pneg %p64
      $region50: #{decoder_block_forward.4} parent=43 // pred_check_branch
        %335 = sbr.rel (%p333) target = $region52
      $region51: #{decoder_block_forward.4} parent=43 // pred_region
        %p336 = scmp.lt.s32.totalorder %s18, 1
        %s337 = scalar_select %p336, %s18, 1
        %s338 = smul.addr %s337, 2
        %s339 = smul.addr %s338, 4
        %s340 = scalar_lea.vmem %s1, %s339
      $region52: #{decoder_block_forward.4} parent=43 // pred_fallthru
        _
    $region44: #{decoder_block_forward.4} parent=5 // pred_fallthru
      _
    %p341 = scmp.le.s32.totalorder 1, %s18
    %p342 = scmp.lt.s32.totalorder %s18, 3
    %p343 = pnand %p341, %p342
    %p344 = pneg %p343
    // Predicated region
    $region53: #{decoder_block_forward.4} parent=5 // pred_check
      _
    $region54: #{decoder_block_forward.4} parent=5 // pred_check_branch
      %346 = sbr.rel (%p343) target = $region56
    $region55: #{decoder_block_forward.4} parent=5 // pred_region
      %s347 = ssub.s32 %s18, 1
      %p348 = scmp.lt.s32.totalorder %s23, 1
      %s349 = scalar_select %p348, %s23, 1
      %s350 = smul.addr %s349, 2
      %s351 = smul.addr %s350, 8
      %s352 = scalar_lea.vmem %s0, %s351
      %p353 = pneg %p44
      %p354 = pneg %p41
      %p355 = scmp.lt.s32.totalorder %s23, 1
      %s356 = scalar_select %p355, %s23, 1
      %s357 = smul.addr %s356, 2
      %s358 = smul.addr %s357, 4
      %s359 = scalar_lea.vmem %s1, %s358
      %p360 = pneg %p70
      %p361 = pneg %p67
      %p362 = pneg %p91
      %p363 = pneg %p88
      %p364 = pneg %p112
      %p365 = pneg %p109
      %p366 = pneg %p133
      %p367 = pneg %p130
      %p368 = pneg %p154
      %p369 = pneg %p151
      %p370 = pneg %p175
      %p371 = pneg %p172
      %p372 = pneg %p196
      %p373 = pneg %p193
      %p374 = pneg %p217
      %p375 = pneg %p214
      %p376 = pneg %p243
      %p377 = pneg %p240
      %p378 = scmp.lt.s32.totalorder %s23, 1
      %s379 = scalar_select %p378, %s23, 1
      %s380 = smul.addr %s379, 2
      %s381 = smul.addr %s380, 4
      %s382 = scalar_lea.vmem %s9, %s381
      %p383 = pneg %p264
      %p384 = pneg %p261
      %p385 = pneg %p285
      %p386 = pneg %p282
      %p387 = scmp.lt.s32.totalorder %s23, 1
      %s388 = scalar_select %p387, %s23, 1
      %s389 = smul.addr %s388, 2
      %s390 = smul.addr %s389, 8
      %s391 = scalar_lea.vmem %s0, %s390
      %p392 = scmp.lt.s32.totalorder %s23, 1
      %s393 = scalar_select %p392, %s23, 1
      %s394 = smul.addr %s393, 2
      %s395 = smul.addr %s394, 4
      %s396 = scalar_lea.vmem %s1, %s395
      %p397 = scmp.lt.s32.totalorder %s23, 1
      %s398 = scalar_select %p397, %s23, 1
      %s399 = smul.addr %s398, 2
      %s400 = smul.addr %s399, 4
      %s401 = scalar_lea.vmem %s9, %s400
      %p403 = scmp.eq.s32.totalorder %s23, 0
      // Predicated region
      $region57: #{decoder_block_forward.4} parent=55 // pred_check
        %p404 = pneg %p403
      $region58: #{decoder_block_forward.4} parent=55 // pred_check_branch
        %406 = sbr.rel (%p404) target = $region60
      $region59: #{decoder_block_forward.4} parent=55 // pred_region
        %vm407 = vcmask 3072
        %408 = vst.msk [vmem:[%s10] sm:$0xf] %vm407, 0.0
        %409 = vst.msk [vmem:[%s11] sm:$0xf] %vm407, 0.0
      $region60: #{decoder_block_forward.4} parent=55 // pred_fallthru
        _
      %v410 = vld [vmem:[%s391] sm:$0xff]
      %v411 = vld [vmem:[%s391 + $0x8] sm:$0xff]
      %v412 = vld [vmem:[%s2] sm:$0xff]
      %414 = vset.pattern.permute.xlu0 0
      %415 = vperm.xlu0 %414, %v412
      %v416 = vpop.permute.xlu0 %415
      %v418 = vmul.f32 %v410, %v416
      %v419 = vmul.f32 %v411, %v416
      %v420 = vld [vmem:[%s3] sm:$0xff]
      %422 = vset.pattern.permute.xlu0 0
      %423 = vperm.xlu0 %422, %v420
      %v424 = vpop.permute.xlu0 %423
      %v426 = vadd.f32 %v418, %v424
      %v427 = vadd.f32 %v419, %v424
      %v428 = vmax.f32 %v426, 0.0
      %v429 = vmax.f32 %v427, 0.0
      %v430 = vld [vmem:[%s396] sm:$0xff]
      %v431 = vld [vmem:[%s4] sm:$0xf]
      %433 = vset.pattern.permute.xlu0 0
      %434 = vperm.xlu0 %433, %v431
      %v435 = vpop.permute.xlu0 %434
      %v437 = vunpack.c.l.s4 839922192
      %v438 = vunpack.c.0.s8 %v437
      %v439 = vlaneseq
      %v440 = vshrl.u32 %v439, 7
      %v441 = vsub.s32 %v438, %v440
      %v442 = vrot.slane %v435, %v441
      %v444 = vmul.f32 %v430, %v442
      %v445 = vld [vmem:[%s5] sm:$0xf]
      %447 = vset.pattern.permute.xlu0 0
      %448 = vperm.xlu0 %447, %v445
      %v449 = vpop.permute.xlu0 %448
      %v451 = vunpack.c.l.s4 839922192
      %v452 = vunpack.c.0.s8 %v451
      %v453 = vlaneseq
      %v454 = vshrl.u32 %v453, 7
      %v455 = vsub.s32 %v452, %v454
      %v456 = vrot.slane %v449, %v455
      %v458 = vadd.f32 %v444, %v456
      %v459 = vmax.f32 %v458, 0.0
      %v461 = vcombine.high %v459, %v459
      %vm463 = vcmask 1043456
      %v464 = vsel %vm463, %v459, 0.0
      %v465 = vsel %vm463, %v461, 0.0
      %v466 = vld [vmem:[%s8] sm:$0xff]
      %v467 = vld [vmem:[%s8 + $0x8] sm:$0xff]
      %v468 = vld [vmem:[%s8 + $0x10] sm:$0x1]
      %v469 = vld [vmem:[%s8 + $0x18] sm:$0x1]
      %470 = vrot.lane.b32.xlu0 %v428, 17
      %v471 = vpop.permute.xlu0 %470
      %472 = vrot.lane.b32.xlu0 %v464, 17
      %v473 = vpop.permute.xlu0 %472
      %474 = vrot.lane.b32.xlu0 %v429, 17
      %v475 = vpop.permute.xlu0 %474
      %476 = vrot.lane.b32.xlu0 %v465, 17
      %v477 = vpop.permute.xlu0 %476
      %v478 = vlaneseq
      %v479 = vand.u32 %v478, 127
      %vm480 = vcmp.lt.s32.totalorder %v479, 17
      %v481 = vsel %vm480, %v471, %v475
      %v482 = vsel %vm480, %v473, %v477
      %v483 = vsel %vm480, %v475, %v471
      %v484 = vsel %vm480, %v477, %v473
      %v485 = vlaneseq
      %v486 = vshrl.u32 %v485, 7
      %v487 = vsub.s32 0, %v486
      %v488 = vrot.slane %v466, %v487
      %v489 = vlaneseq
      %v490 = vshrl.u32 %v489, 7
      %v491 = vsub.s32 0, %v490
      %v492 = vrot.slane %v467, %v491
      %v493 = vmul.f32 %v483, %v488
      %v494 = vmul.f32 %v481, %v492
      %v495 = vmul.f32 %v484, %v488
      %v496 = vmul.f32 %v482, %v492
      %497 = vst [vmem:[#allocation2] sm:$0xff] %v493
      %498 = vst [vmem:[#allocation2 + $0x8] sm:$0xff] %v494
      %499 = vst [vmem:[#allocation2 + $0x10] sm:$0xff] %v495
      %500 = vst [vmem:[#allocation2 + $0x18] sm:$0xff] %v496
      %501 = vrot.lane.b32.xlu0 %v428, 16
      %v502 = vpop.permute.xlu0 %501
      %503 = vrot.lane.b32.xlu0 %v464, 16
      %v504 = vpop.permute.xlu0 %503
      %505 = vrot.lane.b32.xlu0 %v429, 16
      %v506 = vpop.permute.xlu0 %505
      %507 = vrot.lane.b32.xlu0 %v465, 16
      %v508 = vpop.permute.xlu0 %507
      %vm509 = vcmp.lt.s32.totalorder %v479, 16
      %v510 = vsel %vm509, %v502, %v506
      %v511 = vsel %vm509, %v504, %v508
      %v512 = vsel %vm509, %v506, %v502
      %v513 = vsel %vm509, %v508, %v504
      %v514 = vlaneseq
      %v515 = vshrl.u32 %v514, 7
      %v516 = vsub.s32 1, %v515
      %v517 = vrot.slane %v466, %v516
      %v518 = vlaneseq
      %v519 = vshrl.u32 %v518, 7
      %v520 = vsub.s32 1, %v519
      %v521 = vrot.slane %v467, %v520
      %v522 = vmul.f32 %v512, %v517
      %v523 = vmul.f32 %v510, %v521
      %v524 = vmul.f32 %v513, %v517
      %v525 = vmul.f32 %v511, %v521
      %526 = vst [vmem:[#allocation2 + $0x20] sm:$0xff] %v522
      %527 = vst [vmem:[#allocation2 + $0x28] sm:$0xff] %v523
      %528 = vst [vmem:[#allocation2 + $0x30] sm:$0xff] %v524
      %529 = vst [vmem:[#allocation2 + $0x38] sm:$0xff] %v525
      %530 = vrot.lane.b32.xlu0 %v428, 15
      %v531 = vpop.permute.xlu0 %530
      %532 = vrot.lane.b32.xlu0 %v464, 15
      %v533 = vpop.permute.xlu0 %532
      %534 = vrot.lane.b32.xlu0 %v429, 15
      %v535 = vpop.permute.xlu0 %534
      %536 = vrot.lane.b32.xlu0 %v465, 15
      %v537 = vpop.permute.xlu0 %536
      %vm538 = vcmp.lt.s32.totalorder %v479, 15
      %v539 = vsel %vm538, %v531, %v535
      %v540 = vsel %vm538, %v533, %v537
      %v541 = vsel %vm538, %v535, %v531
      %v542 = vsel %vm538, %v537, %v533
      %v543 = vlaneseq
      %v544 = vshrl.u32 %v543, 7
      %v545 = vsub.s32 2, %v544
      %v546 = vrot.slane %v466, %v545
      %v547 = vlaneseq
      %v548 = vshrl.u32 %v547, 7
      %v549 = vsub.s32 2, %v548
      %v550 = vrot.slane %v467, %v549
      %v551 = vmul.f32 %v541, %v546
      %v552 = vmul.f32 %v539, %v550
      %v553 = vmul.f32 %v542, %v546
      %v554 = vmul.f32 %v540, %v550
      %555 = vst [vmem:[#allocation2 + $0x40] sm:$0xff] %v551
      %556 = vst [vmem:[#allocation2 + $0x48] sm:$0xff] %v552
      %557 = vst [vmem:[#allocation2 + $0x50] sm:$0xff] %v553
      %558 = vst [vmem:[#allocation2 + $0x58] sm:$0xff] %v554
      %559 = vrot.lane.b32.xlu0 %v428, 1
      %v560 = vpop.permute.xlu0 %559
      %561 = vrot.lane.b32.xlu0 %v464, 1
      %v562 = vpop.permute.xlu0 %561
      %563 = vrot.lane.b32.xlu0 %v429, 1
      %v564 = vpop.permute.xlu0 %563
      %565 = vrot.lane.b32.xlu0 %v465, 1
      %v566 = vpop.permute.xlu0 %565
      %vm567 = vcmp.lt.s32.totalorder %v479, 1
      %v568 = vsel %vm567, %v560, %v564
      %v569 = vsel %vm567, %v562, %v566
      %v570 = vsel %vm567, %v564, %v560
      %v571 = vsel %vm567, %v566, %v562
      %v572 = vlaneseq
      %v573 = vshrl.u32 %v572, 7
      %v574 = vsub.s32 3, %v573
      %v575 = vrot.slane %v466, %v574
      %v576 = vlaneseq
      %v577 = vshrl.u32 %v576, 7
      %v578 = vsub.s32 3, %v577
      %v579 = vrot.slane %v467, %v578
      %v580 = vmul.f32 %v570, %v575
      %v581 = vmul.f32 %v568, %v579
      %v582 = vmul.f32 %v571, %v575
      %v583 = vmul.f32 %v569, %v579
      %584 = vst [vmem:[#allocation2 + $0x60] sm:$0xff] %v580
      %585 = vst [vmem:[#allocation2 + $0x68] sm:$0xff] %v581
      %586 = vst [vmem:[#allocation2 + $0x70] sm:$0xff] %v582
      %587 = vst [vmem:[#allocation2 + $0x78] sm:$0xff] %v583
      %v588 = vlaneseq
      %v589 = vshrl.u32 %v588, 7
      %v590 = vsub.s32 4, %v589
      %v591 = vrot.slane %v466, %v590
      %v592 = vlaneseq
      %v593 = vshrl.u32 %v592, 7
      %v594 = vsub.s32 4, %v593
      %v595 = vrot.slane %v467, %v594
      %v596 = vmul.f32 %v428, %v591
      %v597 = vmul.f32 %v429, %v595
      %v598 = vmul.f32 %v464, %v591
      %v599 = vmul.f32 %v465, %v595
      %600 = vst [vmem:[#allocation2 + $0x80] sm:$0xff] %v596
      %601 = vst [vmem:[#allocation2 + $0x88] sm:$0xff] %v597
      %602 = vst [vmem:[#allocation2 + $0x90] sm:$0xff] %v598
      %603 = vst [vmem:[#allocation2 + $0x98] sm:$0xff] %v599
      %604 = vrot.lane.b32.xlu0 %v428, 127
      %v605 = vpop.permute.xlu0 %604
      %606 = vrot.lane.b32.xlu0 %v464, 127
      %v607 = vpop.permute.xlu0 %606
      %608 = vrot.lane.b32.xlu0 %v429, 127
      %v609 = vpop.permute.xlu0 %608
      %610 = vrot.lane.b32.xlu0 %v465, 127
      %v611 = vpop.permute.xlu0 %610
      %vm612 = vcmp.lt.s32.totalorder %v479, 127
      %v613 = vsel %vm612, %v605, %v609
      %v614 = vsel %vm612, %v607, %v611
      %v615 = vsel %vm612, %v609, %v605
      %v616 = vsel %vm612, %v611, %v607
      %v617 = vlaneseq
      %v618 = vshrl.u32 %v617, 7
      %v619 = vsub.s32 5, %v618
      %v620 = vrot.slane %v466, %v619
      %v621 = vlaneseq
      %v622 = vshrl.u32 %v621, 7
      %v623 = vsub.s32 5, %v622
      %v624 = vrot.slane %v467, %v623
      %v625 = vmul.f32 %v613, %v620
      %v626 = vmul.f32 %v615, %v624
      %v627 = vmul.f32 %v614, %v620
      %v628 = vmul.f32 %v616, %v624
      %629 = vst [vmem:[#allocation2 + $0xa0] sm:$0xff] %v625
      %630 = vst [vmem:[#allocation2 + $0xa8] sm:$0xff] %v626
      %631 = vst [vmem:[#allocation2 + $0xb0] sm:$0xff] %v627
      %632 = vst [vmem:[#allocation2 + $0xb8] sm:$0xff] %v628
      %633 = vrot.lane.b32.xlu0 %v428, 113
      %v634 = vpop.permute.xlu0 %633
      %635 = vrot.lane.b32.xlu0 %v464, 113
      %v636 = vpop.permute.xlu0 %635
      %637 = vrot.lane.b32.xlu0 %v429, 113
      %v638 = vpop.permute.xlu0 %637
      %639 = vrot.lane.b32.xlu0 %v465, 113
      %v640 = vpop.permute.xlu0 %639
      %vm641 = vcmp.lt.s32.totalorder %v479, 113
      %v642 = vsel %vm641, %v634, %v638
      %v643 = vsel %vm641, %v636, %v640
      %v644 = vsel %vm641, %v638, %v634
      %v645 = vsel %vm641, %v640, %v636
      %v646 = vlaneseq
      %v647 = vshrl.u32 %v646, 7
      %v648 = vsub.s32 6, %v647
      %v649 = vrot.slane %v466, %v648
      %v650 = vlaneseq
      %v651 = vshrl.u32 %v650, 7
      %v652 = vsub.s32 6, %v651
      %v653 = vrot.slane %v467, %v652
      %v654 = vmul.f32 %v642, %v649
      %v655 = vmul.f32 %v644, %v653
      %v656 = vmul.f32 %v643, %v649
      %v657 = vmul.f32 %v645, %v653
      %658 = vst [vmem:[#allocation2 + $0xc0] sm:$0xff] %v654
      %659 = vst [vmem:[#allocation2 + $0xc8] sm:$0xff] %v655
      %660 = vst [vmem:[#allocation2 + $0xd0] sm:$0xff] %v656
      %661 = vst [vmem:[#allocation2 + $0xd8] sm:$0xff] %v657
      %662 = vrot.lane.b32.xlu0 %v428, 112
      %v663 = vpop.permute.xlu0 %662
      %664 = vrot.lane.b32.xlu0 %v464, 112
      %v665 = vpop.permute.xlu0 %664
      %666 = vrot.lane.b32.xlu0 %v429, 112
      %v667 = vpop.permute.xlu0 %666
      %668 = vrot.lane.b32.xlu0 %v465, 112
      %v669 = vpop.permute.xlu0 %668
      %vm670 = vcmp.lt.s32.totalorder %v479, 112
      %v671 = vsel %vm670, %v663, %v667
      %v672 = vsel %vm670, %v665, %v669
      %v673 = vsel %vm670, %v667, %v663
      %v674 = vsel %vm670, %v669, %v665
      %v675 = vlaneseq
      %v676 = vshrl.u32 %v675, 7
      %v677 = vsub.s32 7, %v676
      %v678 = vrot.slane %v466, %v677
      %v679 = vlaneseq
      %v680 = vshrl.u32 %v679, 7
      %v681 = vsub.s32 7, %v680
      %v682 = vrot.slane %v467, %v681
      %v683 = vmul.f32 %v671, %v678
      %v684 = vmul.f32 %v673, %v682
      %v685 = vmul.f32 %v672, %v678
      %v686 = vmul.f32 %v674, %v682
      %687 = vst [vmem:[#allocation2 + $0xe0] sm:$0xff] %v683
      %688 = vst [vmem:[#allocation2 + $0xe8] sm:$0xff] %v684
      %689 = vst [vmem:[#allocation2 + $0xf0] sm:$0xff] %v685
      %690 = vst [vmem:[#allocation2 + $0xf8] sm:$0xff] %v686
      %691 = vrot.lane.b32.xlu0 %v428, 111
      %v692 = vpop.permute.xlu0 %691
      %693 = vrot.lane.b32.xlu0 %v464, 111
      %v694 = vpop.permute.xlu0 %693
      %695 = vrot.lane.b32.xlu0 %v429, 111
      %v696 = vpop.permute.xlu0 %695
      %697 = vrot.lane.b32.xlu0 %v465, 111
      %v698 = vpop.permute.xlu0 %697
      %vm699 = vcmp.lt.s32.totalorder %v479, 111
      %v700 = vsel %vm699, %v692, %v696
      %v701 = vsel %vm699, %v694, %v698
      %v702 = vsel %vm699, %v696, %v692
      %v703 = vsel %vm699, %v698, %v694
      %v704 = vlaneseq
      %v705 = vshrl.u32 %v704, 7
      %v706 = vsub.s32 0, %v705
      %v707 = vrot.slane %v468, %v706
      %v708 = vlaneseq
      %v709 = vshrl.u32 %v708, 7
      %v710 = vsub.s32 0, %v709
      %v711 = vrot.slane %v469, %v710
      %v712 = vmul.f32 %v700, %v707
      %v713 = vmul.f32 %v702, %v711
      %v714 = vmul.f32 %v701, %v707
      %v715 = vmul.f32 %v703, %v711
      %716 = vst [vmem:[#allocation2 + $0x100] sm:$0xff] %v712
      %717 = vst [vmem:[#allocation2 + $0x108] sm:$0xff] %v713
      %718 = vst [vmem:[#allocation2 + $0x110] sm:$0xff] %v714
      %719 = vst [vmem:[#allocation2 + $0x118] sm:$0xff] %v715
      %v720 = vld [vmem:[#allocation2] sm:$0xff]
      %v721 = vld [vmem:[#allocation2 + $0x8] sm:$0xff]
      %v722 = vld [vmem:[#allocation2 + $0x10] sm:$0xff]
      %v723 = vld [vmem:[#allocation2 + $0x18] sm:$0xff]
      %v724 = vld [vmem:[#allocation2 + $0x20] sm:$0xff]
      %v725 = vld [vmem:[#allocation2 + $0x28] sm:$0xff]
      %v726 = vld [vmem:[#allocation2 + $0x30] sm:$0xff]
      %v727 = vld [vmem:[#allocation2 + $0x38] sm:$0xff]
      %v728 = vld [vmem:[#allocation2 + $0x40] sm:$0xff]
      %v729 = vld [vmem:[#allocation2 + $0x48] sm:$0xff]
      %v730 = vld [vmem:[#allocation2 + $0x50] sm:$0xff]
      %v731 = vld [vmem:[#allocation2 + $0x58] sm:$0xff]
      %v732 = vld [vmem:[#allocation2 + $0x60] sm:$0xff]
      %v733 = vld [vmem:[#allocation2 + $0x68] sm:$0xff]
      %v734 = vld [vmem:[#allocation2 + $0x70] sm:$0xff]
      %v735 = vld [vmem:[#allocation2 + $0x78] sm:$0xff]
      %v736 = vld [vmem:[#allocation2 + $0x80] sm:$0xff]
      %v737 = vld [vmem:[#allocation2 + $0x88] sm:$0xff]
      %v738 = vld [vmem:[#allocation2 + $0x90] sm:$0xff]
      %v739 = vld [vmem:[#allocation2 + $0x98] sm:$0xff]
      %v740 = vld [vmem:[#allocation2 + $0xa0] sm:$0xff]
      %v741 = vld [vmem:[#allocation2 + $0xa8] sm:$0xff]
      %v742 = vld [vmem:[#allocation2 + $0xb0] sm:$0xff]
      %v743 = vld [vmem:[#allocation2 + $0xb8] sm:$0xff]
      %v744 = vld [vmem:[#allocation2 + $0xc0] sm:$0xff]
      %v745 = vld [vmem:[#allocation2 + $0xc8] sm:$0xff]
      %v746 = vld [vmem:[#allocation2 + $0xd0] sm:$0xff]
      %v747 = vld [vmem:[#allocation2 + $0xd8] sm:$0xff]
      %v748 = vld [vmem:[#allocation2 + $0xe0] sm:$0xff]
      %v749 = vld [vmem:[#allocation2 + $0xe8] sm:$0xff]
      %v750 = vld [vmem:[#allocation2 + $0xf0] sm:$0xff]
      %v751 = vld [vmem:[#allocation2 + $0xf8] sm:$0xff]
      %v752 = vld [vmem:[#allocation2 + $0x100] sm:$0xff]
      %v753 = vld [vmem:[#allocation2 + $0x108] sm:$0xff]
      %v754 = vld [vmem:[#allocation2 + $0x110] sm:$0xff]
      %v755 = vld [vmem:[#allocation2 + $0x118] sm:$0xff]
      %v756 = vpack.c.bf16 %v722, %v720
      %v757 = vpack.c.bf16 %v723, %v721
      %v758 = vpack.c.bf16 %v726, %v724
      %v759 = vpack.c.bf16 %v727, %v725
      %v760 = vpack.c.bf16 %v730, %v728
      %v761 = vpack.c.bf16 %v731, %v729
      %v762 = vpack.c.bf16 %v734, %v732
      %v763 = vpack.c.bf16 %v735, %v733
      %v764 = vpack.c.bf16 %v738, %v736
      %v765 = vpack.c.bf16 %v739, %v737
      %v766 = vpack.c.bf16 %v742, %v740
      %v767 = vpack.c.bf16 %v743, %v741
      %v768 = vpack.c.bf16 %v746, %v744
      %v769 = vpack.c.bf16 %v747, %v745
      %v770 = vpack.c.bf16 %v750, %v748
      %v771 = vpack.c.bf16 %v751, %v749
      %v772 = vpack.c.bf16 %v754, %v752
      %v773 = vpack.c.bf16 %v755, %v753
      %v774 = vld [vmem:[%s6] sm:$0xf]
      %v775 = vld [vmem:[%s7] sm:$0xf]
      %777 = vset.pattern.permute.xlu0 0
      %778 = vperm.xlu0 %777, %v775
      %v779 = vpop.permute.xlu0 %778
      %v783 = vunpack.c.l.s4 1983009808
      %v784 = vunpack.c.0.s8 %v783
      %v785 = vlaneseq
      %v786 = vshrl.u32 %v785, 7
      %v787 = vsub.s32 %v784, %v786
      %v788 = vrot.slane %v774, %v787
      %v789 = vcombine.high %v788, %v788
      %vm791 = vcmask 130048
      %v793 = vsel %vm791, %v789, 0
      %795 = vmatprep.subr.bf16.mxu0 %v757
      %796 = vmatpush1.bf16.msra.mxu0 %v756
      %797 = vmatprep.subr.bf16.mxu0 %v759
      %798 = vmatpush1.bf16.msra.mxu0 %v758
      %799 = vmatprep.subr.bf16.mxu0 %v761
      %800 = vmatpush1.bf16.msra.mxu0 %v760
      %801 = vmatprep.subr.bf16.mxu0 %v763
      %802 = vmatpush1.bf16.msra.mxu0 %v762
      %803 = vmatprep.subr.bf16.mxu0 %v765
      %804 = vmatpush1.bf16.msra.mxu0 %v764
      %805 = vmatprep.subr.bf16.mxu0 %v767
      %806 = vmatpush1.bf16.msra.mxu0 %v766
      %807 = vmatprep.subr.bf16.mxu0 %v769
      %808 = vmatpush1.bf16.msra.mxu0 %v768
      %809 = vmatprep.subr.bf16.mxu0 %v771
      %810 = vmatpush1.bf16.msra.mxu0 %v770
      %811 = vmatprep.subr.bf16.mxu0 %v773
      %812 = vmatpush1.bf16.msra.mxu0 %v772
      %813 = vmatprep.subr.bf16.mxu0 0
      %814 = vmatpush1.bf16.msra.mxu0 0
      %815 = vmatprep.subr.bf16.mxu0 0
      %816 = vmatpush1.bf16.msra.mxu0 0
      %817 = vmatprep.subr.bf16.mxu0 0
      %818 = vmatpush1.bf16.msra.mxu0 0
      %819 = vmatprep.subr.bf16.mxu0 0
      %820 = vmatpush1.bf16.msra.mxu0 0
      %821 = vmatprep.subr.bf16.mxu0 0
      %822 = vmatpush1.bf16.msra.mxu0 0
      %823 = vmatprep.subr.bf16.mxu0 0
      %824 = vmatpush1.bf16.msra.mxu0 0
      %825 = vmatprep.subr.bf16.mxu0 0
      %826 = vmatpush1.bf16.msra.mxu0 0
      %827 = vmatprep.mubr.bf16.mxu0 %v793
      %828 = vmatmul.mubr.bf16.gmra.mrb[0].mxu0 %v788
      %v829 = vpop.f32.mrb[0].mxu0
      %v830 = vadd.f32 %v779, %v829
      %v831 = vpop.f32.mrb[0].mxu0
      %v832 = vadd.f32 %v779, %v831
      %v833 = vpop.f32.mrb[0].mxu0
      %v834 = vpop.f32.mrb[0].mxu0
      %835 = vdwg.mxu0
      %v838 = vcombine.low %v830, %v832
      %840 = vst [vmem:[%s401] sm:$0xff] %v838
      %v841 = vld [vmem:[%s10] sm:$0xf]
      %v842 = vsel %vm463, %v830, 0.0
      %v843 = vsel %vm463, %v832, 0.0
      %v844 = vadd.f32 %v842, %v843
      %845 = vadd.xlane.f32.xlu0 %v844
      %v846 = vpop.xlane.xlu0 %845
      %v847 = vadd.f32 %v841, %v846
      %vm848 = vcmask 3072
      %849 = vst.msk [vmem:[%s10] sm:$0xf] %vm848, %v847
      %v850 = vld [vmem:[%s11] sm:$0xf]
      %v851 = vmul.f32 %v830, %v830
      %v852 = vmul.f32 %v832, %v832
      %v853 = vsel %vm463, %v851, 0.0
      %v854 = vsel %vm463, %v852, 0.0
      %v855 = vadd.f32 %v853, %v854
      %856 = vadd.xlane.f32.xlu0 %v855
      %v857 = vpop.xlane.xlu0 %856
      %v858 = vadd.f32 %v850, %v857
      %859 = vst.msk [vmem:[%s11] sm:$0xf] %vm848, %v858
      %p860 = scmp.lt.s32.totalorder %s23, 1
      %s861 = scalar_select %p860, %s23, 1
      %s862 = smul.addr %s861, 2
      %s863 = smul.addr %s862, 4
      %s864 = scalar_lea.vmem %s9, %s863
      // Predicated region
      $region61: #{decoder_block_forward.4} parent=55 // pred_check
        %p865 = pneg %p240
      $region62: #{decoder_block_forward.4} parent=55 // pred_check_branch
        %867 = sbr.rel (%p865) target = $region64
      $region63: #{decoder_block_forward.4} parent=55 // pred_region
        _
      $region64: #{decoder_block_forward.4} parent=55 // pred_fallthru
        _
      // Predicated region
      $region65: #{decoder_block_forward.4} parent=55 // pred_check
        %p868 = pneg %p261
      $region66: #{decoder_block_forward.4} parent=55 // pred_check_branch
        %870 = sbr.rel (%p868) target = $region68
      $region67: #{decoder_block_forward.4} parent=55 // pred_region
        _
      $region68: #{decoder_block_forward.4} parent=55 // pred_fallthru
        _
      // Predicated region
      $region69: #{decoder_block_forward.4} parent=55 // pred_check
        %p871 = pneg %p282
      $region70: #{decoder_block_forward.4} parent=55 // pred_check_branch
        %873 = sbr.rel (%p871) target = $region72
      $region71: #{decoder_block_forward.4} parent=55 // pred_region
        _
      $region72: #{decoder_block_forward.4} parent=55 // pred_fallthru
        _
      // Predicated region
      $region73: #{decoder_block_forward.4} parent=55 // pred_check
        %p874 = pneg %p261
      $region74: #{decoder_block_forward.4} parent=55 // pred_check_branch
        %876 = sbr.rel (%p874) target = $region76
      $region75: #{decoder_block_forward.4} parent=55 // pred_region
        _
      $region76: #{decoder_block_forward.4} parent=55 // pred_fallthru
        _
      // Predicated region
      $region77: #{decoder_block_forward.4} parent=55 // pred_check
        %p877 = pneg %p282
      $region78: #{decoder_block_forward.4} parent=55 // pred_check_branch
        %879 = sbr.rel (%p877) target = $region80
      $region79: #{decoder_block_forward.4} parent=55 // pred_region
        _
      $region80: #{decoder_block_forward.4} parent=55 // pred_fallthru
        _
    $region56: #{decoder_block_forward.4} parent=5 // pred_fallthru
      _
    %p880 = scmp.le.s32.totalorder 2, %s18
    // Predicated region
    $region81: #{decoder_block_forward.4} parent=5 // pred_check
      %p881 = pneg %p880
    $region82: #{decoder_block_forward.4} parent=5 // pred_check_branch
      %883 = sbr.rel (%p881) target = $region84
    $region83: #{decoder_block_forward.4} parent=5 // pred_region
      %s884 = ssub.s32 %s18, 2
      // Predicated region
      $region85: #{decoder_block_forward.4} parent=83 // pred_check
        %p885 = pneg %p246
      $region86: #{decoder_block_forward.4} parent=83 // pred_check_branch
        %887 = sbr.rel (%p885) target = $region88
      $region87: #{decoder_block_forward.4} parent=83 // pred_region
        %p888 = scmp.lt.s32.totalorder %s24, 1
        %s889 = scalar_select %p888, %s24, 1
        %s890 = smul.addr %s889, 2
        %s891 = smul.addr %s890, 4
        %s892 = scalar_lea.vmem %s9, %s891
      $region88: #{decoder_block_forward.4} parent=83 // pred_fallthru
        _
    $region84: #{decoder_block_forward.4} parent=5 // pred_fallthru
      _
  $region6: #{decoder_block_forward.4} parent=0 // loop_footer
    %s22 = sadd.s32 1, %s18
  $region7: #{decoder_block_forward.4} parent=0 // loop_footer_branch
    %17 = sbr.rel target = $region3
  $region8: #{decoder_block_forward.4} parent=0 // loop_exit
    _

// kernel: decoder_block_forward.5
$region0: #{decoder_block_forward.5}
  #allocation0 [shape = 'u32[]', space=smem, size = 0x4, offset = 0x4, fixed_abs, tag = 'smem constant byte address 0x4 - core index']
  #allocation1 [shape = 'u32[144,128]{1,0:T(1,128)}', space=vmem, size = 0x12000, scoped, tag = 'internal scratch']
  #allocation2 [shape = 'f32[88,256]{1,0:T(8,128)}', space=vmem, size = 0x16000, scoped, tag = 'scratch operand']
  %s0 = inlined_call_operand.vmem [shape: f32[2,4,256], index: 0, kind: input, shape index: {}]
  %s1 = inlined_call_operand.vmem [shape: f32[2,8,256], index: 1, kind: input, shape index: {}]
  %s2 = inlined_call_operand.vmem [shape: f32[2,4,256], index: 2, kind: input, shape index: {}]
  %s3 = inlined_call_operand.vmem [shape: f32[4,1], index: 3, kind: input, shape index: {}]
  %s4 = inlined_call_operand.vmem [shape: f32[4,1], index: 4, kind: input, shape index: {}]
  %s5 = inlined_call_operand.vmem [shape: bf16[4,88], index: 5, kind: input, shape index: {}]
  %s6 = inlined_call_operand.vmem [shape: f32[4,1], index: 6, kind: input, shape index: {}]
  %s7 = inlined_call_operand.vmem [shape: f32[9,256], index: 7, kind: input, shape index: {}]
  %s8 = inlined_call_operand.vmem [shape: f32[2,4,256], index: 8, kind: output, shape index: {}]
  %s9 = sld [smem:[#allocation0]]
  $region65: #{decoder_block_forward.5} parent=0
    _
  %s11 = ssub.s32 1, %s9
  %s12 = scalar_select 0, %s11, %s9
  loop: start=0, step=1, limit=4
  $region2: #{decoder_block_forward.5} parent=0 // loop_pre_header
    _
  $region3: #{decoder_block_forward.5} parent=0 // loop_header
    %s14 = sphi 0, %s18
    %p15 = scmp.ge.s32.totalorder %s14, 4
    %s24 = sphi 0, %s26
    %s27 = sphi 0, %s24
    %s28 = sphi 0, %s27
    %s44 = sphi 0, %s28
    %s50 = sphi 0, %s52
    %s53 = sphi 0, %s50
    %s54 = sphi 0, %s53
    %s70 = sphi 0, %s54
    %s76 = sphi 0, %s78
    %s79 = sphi 0, %s76
    %s80 = sphi 0, %s79
    %s96 = sphi 0, %s80
    %s100 = sphi 0, %s100
    %s102 = sphi 0, %s100
    %s103 = sphi 0, %s102
    %s117 = sphi 0, %s103
    %s121 = sphi 0, %s121
    %s123 = sphi 0, %s121
    %s124 = sphi 0, %s123
    %s138 = sphi 0, %s124
    %s142 = sphi 0, %s142
    %s144 = sphi 0, %s142
    %s145 = sphi 0, %s144
    %s159 = sphi 0, %s145
    %s163 = sphi 0, %s163
    %s165 = sphi 0, %s163
    %s166 = sphi 0, %s165
    %s180 = sphi 0, %s166
    %s184 = sphi 0, %s184
    %s186 = sphi 0, %s184
    %s187 = sphi 0, %s186
    %s201 = sphi 0, %s187
    %s207 = sphi 0, %s209
    %s210 = sphi 0, %s207
    %s211 = sphi 0, %s210
    %s227 = sphi 0, %s211
  $region4: #{decoder_block_forward.5} parent=0 // loop_header_branch
    %17 = sbr.rel (%p15) target = $region8
  $region5: #{decoder_block_forward.5} parent=0 // loop_body
    %s19 = ssub.s32 %s14, 1
    %s20 = ssub.s32 %s14, 2
    %s21 = sadd.s32 %s14, 1
    %s22 = ssub.s32 %s14, %s21
    %p23 = scmp.eq.s32.totalorder %s22, 0
    %s25 = sadd.s32 %s24, 1
    %s26 = scalar_select %p23, %s24, %s25
    %p29 = pneg %p23
    %p30 = scmp.eq.s32.totalorder %s14, 1
    %p31 = por %p29, %p30
    %p32 = scmp.ne.s32.totalorder %s24, %s27
    %p33 = scmp.eq.s32.totalorder %s14, 0
    %p34 = por %p32, %p33
    %p35 = scmp.ne.s32.totalorder %s24, %s27
    %p36 = scmp.eq.s32.totalorder %s19, 1
    %p37 = por %p35, %p36
    %p38 = scmp.ne.s32.totalorder %s27, %s28
    %p39 = scmp.eq.s32.totalorder %s19, 0
    %p40 = por %p38, %p39
    %p41 = scmp.ne.s32.totalorder %s27, %s28
    %p42 = scmp.eq.s32.totalorder %s20, 1
    %p43 = por %p41, %p42
    %p45 = scmp.ne.s32.totalorder %s28, %s44
    %p46 = scmp.eq.s32.totalorder %s20, 0
    %p47 = por %p45, %p46
    %s48 = ssub.s32 %s14, %s21
    %p49 = scmp.eq.s32.totalorder %s48, 0
    %s51 = sadd.s32 %s50, 1
    %s52 = scalar_select %p49, %s50, %s51
    %p55 = pneg %p49
    %p56 = scmp.eq.s32.totalorder %s14, 1
    %p57 = por %p55, %p56
    %p58 = scmp.ne.s32.totalorder %s50, %s53
    %p59 = scmp.eq.s32.totalorder %s14, 0
    %p60 = por %p58, %p59
    %p61 = scmp.ne.s32.totalorder %s50, %s53
    %p62 = scmp.eq.s32.totalorder %s19, 1
    %p63 = por %p61, %p62
    %p64 = scmp.ne.s32.totalorder %s53, %s54
    %p65 = scmp.eq.s32.totalorder %s19, 0
    %p66 = por %p64, %p65
    %p67 = scmp.ne.s32.totalorder %s53, %s54
    %p68 = scmp.eq.s32.totalorder %s20, 1
    %p69 = por %p67, %p68
    %p71 = scmp.ne.s32.totalorder %s54, %s70
    %p72 = scmp.eq.s32.totalorder %s20, 0
    %p73 = por %p71, %p72
    %s74 = ssub.s32 %s14, %s21
    %p75 = scmp.eq.s32.totalorder %s74, 0
    %s77 = sadd.s32 %s76, 1
    %s78 = scalar_select %p75, %s76, %s77
    %p81 = pneg %p75
    %p82 = scmp.eq.s32.totalorder %s14, 1
    %p83 = por %p81, %p82
    %p84 = scmp.ne.s32.totalorder %s76, %s79
    %p85 = scmp.eq.s32.totalorder %s14, 0
    %p86 = por %p84, %p85
    %p87 = scmp.ne.s32.totalorder %s76, %s79
    %p88 = scmp.eq.s32.totalorder %s19, 1
    %p89 = por %p87, %p88
    %p90 = scmp.ne.s32.totalorder %s79, %s80
    %p91 = scmp.eq.s32.totalorder %s19, 0
    %p92 = por %p90, %p91
    %p93 = scmp.ne.s32.totalorder %s79, %s80
    %p94 = scmp.eq.s32.totalorder %s20, 1
    %p95 = por %p93, %p94
    %p97 = scmp.ne.s32.totalorder %s80, %s96
    %p98 = scmp.eq.s32.totalorder %s20, 0
    %p99 = por %p97, %p98
    %s101 = sadd.s32 %s100, 1
    %p104 = scmp.eq.s32.totalorder %s14, 1
    %p105 = scmp.ne.s32.totalorder %s100, %s102
    %p106 = scmp.eq.s32.totalorder %s14, 0
    %p107 = por %p105, %p106
    %p108 = scmp.ne.s32.totalorder %s100, %s102
    %p109 = scmp.eq.s32.totalorder %s19, 1
    %p110 = por %p108, %p109
    %p111 = scmp.ne.s32.totalorder %s102, %s103
    %p112 = scmp.eq.s32.totalorder %s19, 0
    %p113 = por %p111, %p112
    %p114 = scmp.ne.s32.totalorder %s102, %s103
    %p115 = scmp.eq.s32.totalorder %s20, 1
    %p116 = por %p114, %p115
    %p118 = scmp.ne.s32.totalorder %s103, %s117
    %p119 = scmp.eq.s32.totalorder %s20, 0
    %p120 = por %p118, %p119
    %s122 = sadd.s32 %s121, 1
    %p125 = scmp.eq.s32.totalorder %s14, 1
    %p126 = scmp.ne.s32.totalorder %s121, %s123
    %p127 = scmp.eq.s32.totalorder %s14, 0
    %p128 = por %p126, %p127
    %p129 = scmp.ne.s32.totalorder %s121, %s123
    %p130 = scmp.eq.s32.totalorder %s19, 1
    %p131 = por %p129, %p130
    %p132 = scmp.ne.s32.totalorder %s123, %s124
    %p133 = scmp.eq.s32.totalorder %s19, 0
    %p134 = por %p132, %p133
    %p135 = scmp.ne.s32.totalorder %s123, %s124
    %p136 = scmp.eq.s32.totalorder %s20, 1
    %p137 = por %p135, %p136
    %p139 = scmp.ne.s32.totalorder %s124, %s138
    %p140 = scmp.eq.s32.totalorder %s20, 0
    %p141 = por %p139, %p140
    %s143 = sadd.s32 %s142, 1
    %p146 = scmp.eq.s32.totalorder %s14, 1
    %p147 = scmp.ne.s32.totalorder %s142, %s144
    %p148 = scmp.eq.s32.totalorder %s14, 0
    %p149 = por %p147, %p148
    %p150 = scmp.ne.s32.totalorder %s142, %s144
    %p151 = scmp.eq.s32.totalorder %s19, 1
    %p152 = por %p150, %p151
    %p153 = scmp.ne.s32.totalorder %s144, %s145
    %p154 = scmp.eq.s32.totalorder %s19, 0
    %p155 = por %p153, %p154
    %p156 = scmp.ne.s32.totalorder %s144, %s145
    %p157 = scmp.eq.s32.totalorder %s20, 1
    %p158 = por %p156, %p157
    %p160 = scmp.ne.s32.totalorder %s145, %s159
    %p161 = scmp.eq.s32.totalorder %s20, 0
    %p162 = por %p160, %p161
    %s164 = sadd.s32 %s163, 1
    %p167 = scmp.eq.s32.totalorder %s14, 1
    %p168 = scmp.ne.s32.totalorder %s163, %s165
    %p169 = scmp.eq.s32.totalorder %s14, 0
    %p170 = por %p168, %p169
    %p171 = scmp.ne.s32.totalorder %s163, %s165
    %p172 = scmp.eq.s32.totalorder %s19, 1
    %p173 = por %p171, %p172
    %p174 = scmp.ne.s32.totalorder %s165, %s166
    %p175 = scmp.eq.s32.totalorder %s19, 0
    %p176 = por %p174, %p175
    %p177 = scmp.ne.s32.totalorder %s165, %s166
    %p178 = scmp.eq.s32.totalorder %s20, 1
    %p179 = por %p177, %p178
    %p181 = scmp.ne.s32.totalorder %s166, %s180
    %p182 = scmp.eq.s32.totalorder %s20, 0
    %p183 = por %p181, %p182
    %s185 = sadd.s32 %s184, 1
    %p188 = scmp.eq.s32.totalorder %s14, 1
    %p189 = scmp.ne.s32.totalorder %s184, %s186
    %p190 = scmp.eq.s32.totalorder %s14, 0
    %p191 = por %p189, %p190
    %p192 = scmp.ne.s32.totalorder %s184, %s186
    %p193 = scmp.eq.s32.totalorder %s19, 1
    %p194 = por %p192, %p193
    %p195 = scmp.ne.s32.totalorder %s186, %s187
    %p196 = scmp.eq.s32.totalorder %s19, 0
    %p197 = por %p195, %p196
    %p198 = scmp.ne.s32.totalorder %s186, %s187
    %p199 = scmp.eq.s32.totalorder %s20, 1
    %p200 = por %p198, %p199
    %p202 = scmp.ne.s32.totalorder %s187, %s201
    %p203 = scmp.eq.s32.totalorder %s20, 0
    %p204 = por %p202, %p203
    %s205 = ssub.s32 %s14, %s21
    %p206 = scmp.eq.s32.totalorder %s205, 0
    %s208 = sadd.s32 %s207, 1
    %s209 = scalar_select %p206, %s207, %s208
    %p212 = pneg %p206
    %p213 = scmp.eq.s32.totalorder %s14, 1
    %p214 = por %p212, %p213
    %p215 = scmp.ne.s32.totalorder %s207, %s210
    %p216 = scmp.eq.s32.totalorder %s14, 0
    %p217 = por %p215, %p216
    %p218 = scmp.ne.s32.totalorder %s207, %s210
    %p219 = scmp.eq.s32.totalorder %s19, 1
    %p220 = por %p218, %p219
    %p221 = scmp.ne.s32.totalorder %s210, %s211
    %p222 = scmp.eq.s32.totalorder %s19, 0
    %p223 = por %p221, %p222
    %p224 = scmp.ne.s32.totalorder %s210, %s211
    %p225 = scmp.eq.s32.totalorder %s20, 1
    %p226 = por %p224, %p225
    %p228 = scmp.ne.s32.totalorder %s211, %s227
    %p229 = scmp.eq.s32.totalorder %s20, 0
    %p230 = por %p228, %p229
    %p231 = scmp.le.s32.totalorder 1, %s14
    %p232 = scmp.lt.s32.totalorder %s14, 3
    %p233 = pnand %p231, %p232
    %p234 = pneg %p233
    // Predicated region
    $region9: #{decoder_block_forward.5} parent=5 // pred_check
      _
    $region10: #{decoder_block_forward.5} parent=5 // pred_check_branch
      %236 = sbr.rel (%p233) target = $region12
    $region11: #{decoder_block_forward.5} parent=5 // pred_region
      %s237 = ssub.s32 %s14, 1
      // Predicated region
      $region13: #{decoder_block_forward.5} parent=11 // pred_check
        %p238 = pneg %p113
      $region14: #{decoder_block_forward.5} parent=11 // pred_check_branch
        %240 = sbr.rel (%p238) target = $region16
      $region15: #{decoder_block_forward.5} parent=11 // pred_region
        _
      $region16: #{decoder_block_forward.5} parent=11 // pred_fallthru
        _
      // Predicated region
      $region17: #{decoder_block_forward.5} parent=11 // pred_check
        %p241 = pneg %p134
      $region18: #{decoder_block_forward.5} parent=11 // pred_check_branch
        %243 = sbr.rel (%p241) target = $region20
      $region19: #{decoder_block_forward.5} parent=11 // pred_region
        _
      $region20: #{decoder_block_forward.5} parent=11 // pred_fallthru
        _
      // Predicated region
      $region21: #{decoder_block_forward.5} parent=11 // pred_check
        %p244 = pneg %p155
      $region22: #{decoder_block_forward.5} parent=11 // pred_check_branch
        %246 = sbr.rel (%p244) target = $region24
      $region23: #{decoder_block_forward.5} parent=11 // pred_region
        _
      $region24: #{decoder_block_forward.5} parent=11 // pred_fallthru
        _
      // Predicated region
      $region25: #{decoder_block_forward.5} parent=11 // pred_check
        %p247 = pneg %p176
      $region26: #{decoder_block_forward.5} parent=11 // pred_check_branch
        %249 = sbr.rel (%p247) target = $region28
      $region27: #{decoder_block_forward.5} parent=11 // pred_region
        _
      $region28: #{decoder_block_forward.5} parent=11 // pred_fallthru
        _
      // Predicated region
      $region29: #{decoder_block_forward.5} parent=11 // pred_check
        %p250 = pneg %p197
      $region30: #{decoder_block_forward.5} parent=11 // pred_check_branch
        %252 = sbr.rel (%p250) target = $region32
      $region31: #{decoder_block_forward.5} parent=11 // pred_region
        _
      $region32: #{decoder_block_forward.5} parent=11 // pred_fallthru
        _
    $region12: #{decoder_block_forward.5} parent=5 // pred_fallthru
      _
    %p253 = scmp.lt.s32.totalorder %s14, 2
    // Predicated region
    $region33: #{decoder_block_forward.5} parent=5 // pred_check
      %p254 = pneg %p253
    $region34: #{decoder_block_forward.5} parent=5 // pred_check_branch
      %256 = sbr.rel (%p254) target = $region36
    $region35: #{decoder_block_forward.5} parent=5 // pred_region
      // Predicated region
      $region37: #{decoder_block_forward.5} parent=35 // pred_check
        %p257 = pneg %p34
      $region38: #{decoder_block_forward.5} parent=35 // pred_check_branch
        %259 = sbr.rel (%p257) target = $region40
      $region39: #{decoder_block_forward.5} parent=35 // pred_region
        %p260 = scmp.lt.s32.totalorder %s14, 1
        %s261 = scalar_select %p260, %s14, 1
        %s262 = smul.addr %s261, 2
        %s263 = smul.addr %s262, 4
        %s264 = scalar_lea.vmem %s0, %s263
      $region40: #{decoder_block_forward.5} parent=35 // pred_fallthru
        _
      // Predicated region
      $region41: #{decoder_block_forward.5} parent=35 // pred_check
        %p265 = pneg %p60
      $region42: #{decoder_block_forward.5} parent=35 // pred_check_branch
        %267 = sbr.rel (%p265) target = $region44
      $region43: #{decoder_block_forward.5} parent=35 // pred_region
        %p268 = scmp.lt.s32.totalorder %s14, 1
        %s269 = scalar_select %p268, %s14, 1
        %s270 = smul.addr %s269, 2
        %s271 = smul.addr %s270, 8
        %s272 = scalar_lea.vmem %s1, %s271
      $region44: #{decoder_block_forward.5} parent=35 // pred_fallthru
        _
      // Predicated region
      $region45: #{decoder_block_forward.5} parent=35 // pred_check
        %p273 = pneg %p86
      $region46: #{decoder_block_forward.5} parent=35 // pred_check_branch
        %275 = sbr.rel (%p273) target = $region48
      $region47: #{decoder_block_forward.5} parent=35 // pred_region
        %p276 = scmp.lt.s32.totalorder %s14, 1
        %s277 = scalar_select %p276, %s14, 1
        %s278 = smul.addr %s277, 2
        %s279 = smul.addr %s278, 4
        %s280 = scalar_lea.vmem %s2, %s279
      $region48: #{decoder_block_forward.5} parent=35 // pred_fallthru
        _
    $region36: #{decoder_block_forward.5} parent=5 // pred_fallthru
      _
    %p281 = scmp.le.s32.totalorder 1, %s14
    %p282 = scmp.lt.s32.totalorder %s14, 3
    %p283 = pnand %p281, %p282
    %p284 = pneg %p283
    // Predicated region
    $region49: #{decoder_block_forward.5} parent=5 // pred_check
      _
    $region50: #{decoder_block_forward.5} parent=5 // pred_check_branch
      %286 = sbr.rel (%p283) target = $region52
    $region51: #{decoder_block_forward.5} parent=5 // pred_region
      %s287 = ssub.s32 %s14, 1
      %p288 = scmp.lt.s32.totalorder %s19, 1
      %s289 = scalar_select %p288, %s19, 1
      %s290 = smul.addr %s289, 2
      %s291 = smul.addr %s290, 4
      %s292 = scalar_lea.vmem %s0, %s291
      %p293 = pneg %p40
      %p294 = pneg %p37
      %p295 = scmp.lt.s32.totalorder %s19, 1
      %s296 = scalar_select %p295, %s19, 1
      %s297 = smul.addr %s296, 2
      %s298 = smul.addr %s297, 8
      %s299 = scalar_lea.vmem %s1, %s298
      %p300 = pneg %p66
      %p301 = pneg %p63
      %p302 = scmp.lt.s32.totalorder %s19, 1
      %s303 = scalar_select %p302, %s19, 1
      %s304 = smul.addr %s303, 2
      %s305 = smul.addr %s304, 4
      %s306 = scalar_lea.vmem %s2, %s305
      %p307 = pneg %p92
      %p308 = pneg %p89
      %p309 = pneg %p113
      %p310 = pneg %p110
      %p311 = pneg %p134
      %p312 = pneg %p131
      %p313 = pneg %p155
      %p314 = pneg %p152
      %p315 = pneg %p176
      %p316 = pneg %p173
      %p317 = pneg %p197
      %p318 = pneg %p194
      %p319 = pneg %p223
      %p320 = pneg %p220
      %p321 = scmp.lt.s32.totalorder %s19, 1
      %s322 = scalar_select %p321, %s19, 1
      %s323 = smul.addr %s322, 2
      %s324 = smul.addr %s323, 4
      %s325 = scalar_lea.vmem %s8, %s324
      %p326 = scmp.lt.s32.totalorder %s19, 1
      %s327 = scalar_select %p326, %s19, 1
      %s328 = smul.addr %s327, 2
      %s329 = smul.addr %s328, 4
      %s330 = scalar_lea.vmem %s0, %s329
      %p331 = scmp.lt.s32.totalorder %s19, 1
      %s332 = scalar_select %p331, %s19, 1
      %s333 = smul.addr %s332, 2
      %s334 = smul.addr %s333, 8
      %s335 = scalar_lea.vmem %s1, %s334
      %p336 = scmp.lt.s32.totalorder %s19, 1
      %s337 = scalar_select %p336, %s19, 1
      %s338 = smul.addr %s337, 2
      %s339 = smul.addr %s338, 4
      %s340 = scalar_lea.vmem %s2, %s339
      %p341 = scmp.lt.s32.totalorder %s19, 1
      %s342 = scalar_select %p341, %s19, 1
      %s343 = smul.addr %s342, 2
      %s344 = smul.addr %s343, 4
      %s345 = scalar_lea.vmem %s8, %s344
      %v347 = vld [vmem:[%s330] sm:$0xff]
      %v348 = vld [vmem:[%s3] sm:$0xf]
      %350 = vset.pattern.permute.xlu0 0
      %351 = vperm.xlu0 %350, %v348
      %v352 = vpop.permute.xlu0 %351
      %v354 = vunpack.c.l.s4 839922192
      %v355 = vunpack.c.0.s8 %v354
      %v356 = vlaneseq
      %v357 = vshrl.u32 %v356, 7
      %v358 = vsub.s32 %v355, %v357
      %v359 = vrot.slane %v352, %v358
      %v361 = vmul.f32 %v347, %v359
      %v362 = vld [vmem:[%s4] sm:$0xf]
      %364 = vset.pattern.permute.xlu0 0
      %365 = vperm.xlu0 %364, %v362
      %v366 = vpop.permute.xlu0 %365
      %v368 = vunpack.c.l.s4 839922192
      %v369 = vunpack.c.0.s8 %v368
      %v370 = vlaneseq
      %v371 = vshrl.u32 %v370, 7
      %v372 = vsub.s32 %v369, %v371
      %v373 = vrot.slane %v366, %v372
      %v375 = vadd.f32 %v361, %v373
      %v376 = vmax.f32 %v375, 0.0
      %v378 = vcombine.high %v376, %v376
      %vm380 = vcmask 1043456
      %v381 = vsel %vm380, %v376, 0.0
      %v382 = vsel %vm380, %v378, 0.0
      %v383 = vld [vmem:[%s7] sm:$0xff]
      %v384 = vld [vmem:[%s7 + $0x8] sm:$0xff]
      %v385 = vld [vmem:[%s7 + $0x10] sm:$0x1]
      %v386 = vld [vmem:[%s7 + $0x18] sm:$0x1]
      %387 = vrot.lane.b32.xlu0 %v381, 17
      %v388 = vpop.permute.xlu0 %387
      %389 = vrot.lane.b32.xlu0 %v382, 17
      %v390 = vpop.permute.xlu0 %389
      %v391 = vlaneseq
      %v392 = vand.u32 %v391, 127
      %vm393 = vcmp.lt.s32.totalorder %v392, 17
      %v394 = vsel %vm393, %v388, %v390
      %v395 = vsel %vm393, %v390, %v388
      %v396 = vlaneseq
      %v397 = vshrl.u32 %v396, 7
      %v398 = vsub.s32 0, %v397
      %v399 = vrot.slane %v383, %v398
      %v400 = vlaneseq
      %v401 = vshrl.u32 %v400, 7
      %v402 = vsub.s32 0, %v401
      %v403 = vrot.slane %v384, %v402
      %v404 = vmul.f32 %v395, %v399
      %v405 = vmul.f32 %v394, %v403
      %406 = vst [vmem:[#allocation2] sm:$0xff] %v404
      %407 = vst [vmem:[#allocation2 + $0x8] sm:$0xff] %v405
      %408 = vrot.lane.b32.xlu0 %v381, 16
      %v409 = vpop.permute.xlu0 %408
      %410 = vrot.lane.b32.xlu0 %v382, 16
      %v411 = vpop.permute.xlu0 %410
      %vm412 = vcmp.lt.s32.totalorder %v392, 16
      %v413 = vsel %vm412, %v409, %v411
      %v414 = vsel %vm412, %v411, %v409
      %v415 = vlaneseq
      %v416 = vshrl.u32 %v415, 7
      %v417 = vsub.s32 1, %v416
      %v418 = vrot.slane %v383, %v417
      %v419 = vlaneseq
      %v420 = vshrl.u32 %v419, 7
      %v421 = vsub.s32 1, %v420
      %v422 = vrot.slane %v384, %v421
      %v423 = vmul.f32 %v414, %v418
      %v424 = vmul.f32 %v413, %v422
      %425 = vst [vmem:[#allocation2 + $0x10] sm:$0xff] %v423
      %426 = vst [vmem:[#allocation2 + $0x18] sm:$0xff] %v424
      %427 = vrot.lane.b32.xlu0 %v381, 15
      %v428 = vpop.permute.xlu0 %427
      %429 = vrot.lane.b32.xlu0 %v382, 15
      %v430 = vpop.permute.xlu0 %429
      %vm431 = vcmp.lt.s32.totalorder %v392, 15
      %v432 = vsel %vm431, %v428, %v430
      %v433 = vsel %vm431, %v430, %v428
      %v434 = vlaneseq
      %v435 = vshrl.u32 %v434, 7
      %v436 = vsub.s32 2, %v435
      %v437 = vrot.slane %v383, %v436
      %v438 = vlaneseq
      %v439 = vshrl.u32 %v438, 7
      %v440 = vsub.s32 2, %v439
      %v441 = vrot.slane %v384, %v440
      %v442 = vmul.f32 %v433, %v437
      %v443 = vmul.f32 %v432, %v441
      %444 = vst [vmem:[#allocation2 + $0x20] sm:$0xff] %v442
      %445 = vst [vmem:[#allocation2 + $0x28] sm:$0xff] %v443
      %446 = vrot.lane.b32.xlu0 %v381, 1
      %v447 = vpop.permute.xlu0 %446
      %448 = vrot.lane.b32.xlu0 %v382, 1
      %v449 = vpop.permute.xlu0 %448
      %vm450 = vcmp.lt.s32.totalorder %v392, 1
      %v451 = vsel %vm450, %v447, %v449
      %v452 = vsel %vm450, %v449, %v447
      %v453 = vlaneseq
      %v454 = vshrl.u32 %v453, 7
      %v455 = vsub.s32 3, %v454
      %v456 = vrot.slane %v383, %v455
      %v457 = vlaneseq
      %v458 = vshrl.u32 %v457, 7
      %v459 = vsub.s32 3, %v458
      %v460 = vrot.slane %v384, %v459
      %v461 = vmul.f32 %v452, %v456
      %v462 = vmul.f32 %v451, %v460
      %463 = vst [vmem:[#allocation2 + $0x30] sm:$0xff] %v461
      %464 = vst [vmem:[#allocation2 + $0x38] sm:$0xff] %v462
      %v465 = vlaneseq
      %v466 = vshrl.u32 %v465, 7
      %v467 = vsub.s32 4, %v466
      %v468 = vrot.slane %v383, %v467
      %v469 = vlaneseq
      %v470 = vshrl.u32 %v469, 7
      %v471 = vsub.s32 4, %v470
      %v472 = vrot.slane %v384, %v471
      %v473 = vmul.f32 %v381, %v468
      %v474 = vmul.f32 %v382, %v472
      %475 = vst [vmem:[#allocation2 + $0x40] sm:$0xff] %v473
      %476 = vst [vmem:[#allocation2 + $0x48] sm:$0xff] %v474
      %477 = vrot.lane.b32.xlu0 %v381, 127
      %v478 = vpop.permute.xlu0 %477
      %479 = vrot.lane.b32.xlu0 %v382, 127
      %v480 = vpop.permute.xlu0 %479
      %vm481 = vcmp.lt.s32.totalorder %v392, 127
      %v482 = vsel %vm481, %v478, %v480
      %v483 = vsel %vm481, %v480, %v478
      %v484 = vlaneseq
      %v485 = vshrl.u32 %v484, 7
      %v486 = vsub.s32 5, %v485
      %v487 = vrot.slane %v383, %v486
      %v488 = vlaneseq
      %v489 = vshrl.u32 %v488, 7
      %v490 = vsub.s32 5, %v489
      %v491 = vrot.slane %v384, %v490
      %v492 = vmul.f32 %v482, %v487
      %v493 = vmul.f32 %v483, %v491
      %494 = vst [vmem:[#allocation2 + $0x50] sm:$0xff] %v492
      %495 = vst [vmem:[#allocation2 + $0x58] sm:$0xff] %v493
      %496 = vrot.lane.b32.xlu0 %v381, 113
      %v497 = vpop.permute.xlu0 %496
      %498 = vrot.lane.b32.xlu0 %v382, 113
      %v499 = vpop.permute.xlu0 %498
      %vm500 = vcmp.lt.s32.totalorder %v392, 113
      %v501 = vsel %vm500, %v497, %v499
      %v502 = vsel %vm500, %v499, %v497
      %v503 = vlaneseq
      %v504 = vshrl.u32 %v503, 7
      %v505 = vsub.s32 6, %v504
      %v506 = vrot.slane %v383, %v505
      %v507 = vlaneseq
      %v508 = vshrl.u32 %v507, 7
      %v509 = vsub.s32 6, %v508
      %v510 = vrot.slane %v384, %v509
      %v511 = vmul.f32 %v501, %v506
      %v512 = vmul.f32 %v502, %v510
      %513 = vst [vmem:[#allocation2 + $0x60] sm:$0xff] %v511
      %514 = vst [vmem:[#allocation2 + $0x68] sm:$0xff] %v512
      %515 = vrot.lane.b32.xlu0 %v381, 112
      %v516 = vpop.permute.xlu0 %515
      %517 = vrot.lane.b32.xlu0 %v382, 112
      %v518 = vpop.permute.xlu0 %517
      %vm519 = vcmp.lt.s32.totalorder %v392, 112
      %v520 = vsel %vm519, %v516, %v518
      %v521 = vsel %vm519, %v518, %v516
      %v522 = vlaneseq
      %v523 = vshrl.u32 %v522, 7
      %v524 = vsub.s32 7, %v523
      %v525 = vrot.slane %v383, %v524
      %v526 = vlaneseq
      %v527 = vshrl.u32 %v526, 7
      %v528 = vsub.s32 7, %v527
      %v529 = vrot.slane %v384, %v528
      %v530 = vmul.f32 %v520, %v525
      %v531 = vmul.f32 %v521, %v529
      %532 = vst [vmem:[#allocation2 + $0x70] sm:$0xff] %v530
      %533 = vst [vmem:[#allocation2 + $0x78] sm:$0xff] %v531
      %534 = vrot.lane.b32.xlu0 %v381, 111
      %v535 = vpop.permute.xlu0 %534
      %536 = vrot.lane.b32.xlu0 %v382, 111
      %v537 = vpop.permute.xlu0 %536
      %vm538 = vcmp.lt.s32.totalorder %v392, 111
      %v539 = vsel %vm538, %v535, %v537
      %v540 = vsel %vm538, %v537, %v535
      %v541 = vlaneseq
      %v542 = vshrl.u32 %v541, 7
      %v543 = vsub.s32 0, %v542
      %v544 = vrot.slane %v385, %v543
      %v545 = vlaneseq
      %v546 = vshrl.u32 %v545, 7
      %v547 = vsub.s32 0, %v546
      %v548 = vrot.slane %v386, %v547
      %v549 = vmul.f32 %v539, %v544
      %v550 = vmul.f32 %v540, %v548
      %551 = vst [vmem:[#allocation2 + $0x80] sm:$0xff] %v549
      %552 = vst [vmem:[#allocation2 + $0x88] sm:$0xff] %v550
      %v553 = vld [vmem:[%s335] sm:$0xff]
      %v554 = vld [vmem:[%s335 + $0x8] sm:$0xff]
      %v555 = vld [vmem:[%s340] sm:$0xff]
      %v557 = vcombine.high %v555, %v555
      %v559 = vsel %vm380, %v555, 0.0
      %v560 = vsel %vm380, %v557, 0.0
      %561 = vst [vmem:[#allocation2 + $0x90] sm:$0xff] %v553
      %562 = vst [vmem:[#allocation2 + $0x98] sm:$0xff] %v554
      %563 = vst [vmem:[#allocation2 + $0xa0] sm:$0xff] %v559
      %564 = vst [vmem:[#allocation2 + $0xa8] sm:$0xff] %v560
      %v565 = vld [vmem:[#allocation2] sm:$0xff]
      %v566 = vld [vmem:[#allocation2 + $0x8] sm:$0xff]
      %v567 = vld [vmem:[#allocation2 + $0x10] sm:$0xff]
      %v568 = vld [vmem:[#allocation2 + $0x18] sm:$0xff]
      %v569 = vld [vmem:[#allocation2 + $0x20] sm:$0xff]
      %v570 = vld [vmem:[#allocation2 + $0x28] sm:$0xff]
      %v571 = vld [vmem:[#allocation2 + $0x30] sm:$0xff]
      %v572 = vld [vmem:[#allocation2 + $0x38] sm:$0xff]
      %v573 = vld [vmem:[#allocation2 + $0x40] sm:$0xff]
      %v574 = vld [vmem:[#allocation2 + $0x48] sm:$0xff]
      %v575 = vld [vmem:[#allocation2 + $0x50] sm:$0xff]
      %v576 = vld [vmem:[#allocation2 + $0x58] sm:$0xff]
      %v577 = vld [vmem:[#allocation2 + $0x60] sm:$0xff]
      %v578 = vld [vmem:[#allocation2 + $0x68] sm:$0xff]
      %v579 = vld [vmem:[#allocation2 + $0x70] sm:$0xff]
      %v580 = vld [vmem:[#allocation2 + $0x78] sm:$0xff]
      %v581 = vld [vmem:[#allocation2 + $0x80] sm:$0xff]
      %v582 = vld [vmem:[#allocation2 + $0x88] sm:$0xff]
      %v583 = vld [vmem:[#allocation2 + $0x90] sm:$0xff]
      %v584 = vld [vmem:[#allocation2 + $0x98] sm:$0xff]
      %v585 = vld [vmem:[#allocation2 + $0xa0] sm:$0xff]
      %v586 = vld [vmem:[#allocation2 + $0xa8] sm:$0xff]
      %v587 = vpack.c.bf16 %v567, %v565
      %v588 = vpack.c.bf16 %v568, %v566
      %v589 = vpack.c.bf16 %v571, %v569
      %v590 = vpack.c.bf16 %v572, %v570
      %v591 = vpack.c.bf16 %v575, %v573
      %v592 = vpack.c.bf16 %v576, %v574
      %v593 = vpack.c.bf16 %v579, %v577
      %v594 = vpack.c.bf16 %v580, %v578
      %v595 = vpack.c.bf16 %v583, %v581
      %v596 = vpack.c.bf16 %v584, %v582
      %v597 = vpack.c.bf16 %v585, %v585
      %v598 = vpack.c.bf16 %v586, %v586
      %v599 = vld [vmem:[%s5] sm:$0x3]
      %v600 = vld [vmem:[%s6] sm:$0xf]
      %602 = vset.pattern.permute.xlu0 0
      %603 = vperm.xlu0 %602, %v600
      %v604 = vpop.permute.xlu0 %603
      %vm606 = vcmask 719872
      %v608 = vsel %vm606, %v599, 0
      %v611 = vsel %vm380, %v597, 0
      %v614 = vsel %vm380, %v598, 0
      %616 = vmatprep.subr.bf16.mxu0 %v588
      %617 = vmatpush1.bf16.msra.mxu0 %v587
      %618 = vmatprep.subr.bf16.mxu0 %v590
      %619 = vmatpush1.bf16.msra.mxu0 %v589
      %620 = vmatprep.subr.bf16.mxu0 %v592
      %621 = vmatpush1.bf16.msra.mxu0 %v591
      %622 = vmatprep.subr.bf16.mxu0 %v594
      %623 = vmatpush1.bf16.msra.mxu0 %v593
      %624 = vmatprep.subr.bf16.mxu0 %v596
      %625 = vmatpush1.bf16.msra.mxu0 %v595
      %626 = vmatprep.subr.bf16.mxu0 %v614
      %627 = vmatpush1.bf16.msra.mxu0 %v611
      %628 = vmatprep.subr.bf16.mxu0 0
      %629 = vmatpush1.bf16.msra.mxu0 0
      %630 = vmatprep.subr.bf16.mxu0 0
      %631 = vmatpush1.bf16.msra.mxu0 0
      %632 = vmatprep.subr.bf16.mxu0 0
      %633 = vmatpush1.bf16.msra.mxu0 0
      %634 = vmatprep.subr.bf16.mxu0 0
      %635 = vmatpush1.bf16.msra.mxu0 0
      %636 = vmatprep.subr.bf16.mxu0 0
      %637 = vmatpush1.bf16.msra.mxu0 0
      %638 = vmatprep.subr.bf16.mxu0 0
      %639 = vmatpush1.bf16.msra.mxu0 0
      %640 = vmatprep.subr.bf16.mxu0 0
      %641 = vmatpush1.bf16.msra.mxu0 0
      %642 = vmatprep.subr.bf16.mxu0 0
      %643 = vmatpush1.bf16.msra.mxu0 0
      %644 = vmatprep.subr.bf16.mxu0 0
      %645 = vmatpush1.bf16.msra.mxu0 0
      %646 = vmatprep.subr.bf16.mxu0 0
      %647 = vmatpush1.bf16.msra.mxu0 0
      %648 = vmatprep.mubr.bf16.mxu0 0
      %649 = vmatmul.mubr.bf16.gmra.mrb[0].mxu0 %v608
      %v650 = vpop.f32.mrb[0].mxu0
      %v651 = vadd.f32 %v604, %v650
      %v652 = vpop.f32.mrb[0].mxu0
      %v653 = vadd.f32 %v604, %v652
      %v654 = vpop.f32.mrb[0].mxu0
      %v655 = vpop.f32.mrb[0].mxu0
      %656 = vdwg.mxu0
      %v659 = vcombine.low %v651, %v653
      %661 = vst [vmem:[%s345] sm:$0xff] %v659
      %p662 = scmp.lt.s32.totalorder %s19, 1
      %s663 = scalar_select %p662, %s19, 1
      %s664 = smul.addr %s663, 2
      %s665 = smul.addr %s664, 4
      %s666 = scalar_lea.vmem %s8, %s665
      // Predicated region
      $region53: #{decoder_block_forward.5} parent=51 // pred_check
        %p667 = pneg %p220
      $region54: #{decoder_block_forward.5} parent=51 // pred_check_branch
        %669 = sbr.rel (%p667) target = $region56
      $region55: #{decoder_block_forward.5} parent=51 // pred_region
        _
      $region56: #{decoder_block_forward.5} parent=51 // pred_fallthru
        _
    $region52: #{decoder_block_forward.5} parent=5 // pred_fallthru
      _
    %p670 = scmp.le.s32.totalorder 2, %s14
    // Predicated region
    $region57: #{decoder_block_forward.5} parent=5 // pred_check
      %p671 = pneg %p670
    $region58: #{decoder_block_forward.5} parent=5 // pred_check_branch
      %673 = sbr.rel (%p671) target = $region60
    $region59: #{decoder_block_forward.5} parent=5 // pred_region
      %s674 = ssub.s32 %s14, 2
      // Predicated region
      $region61: #{decoder_block_forward.5} parent=59 // pred_check
        %p675 = pneg %p226
      $region62: #{decoder_block_forward.5} parent=59 // pred_check_branch
        %677 = sbr.rel (%p675) target = $region64
      $region63: #{decoder_block_forward.5} parent=59 // pred_region
        %p678 = scmp.lt.s32.totalorder %s20, 1
        %s679 = scalar_select %p678, %s20, 1
        %s680 = smul.addr %s679, 2
        %s681 = smul.addr %s680, 4
        %s682 = scalar_lea.vmem %s8, %s681
      $region64: #{decoder_block_forward.5} parent=59 // pred_fallthru
        _
    $region60: #{decoder_block_forward.5} parent=5 // pred_fallthru
      _
  $region6: #{decoder_block_forward.5} parent=0 // loop_footer
    %s18 = sadd.s32 1, %s14
  $region7: #{decoder_block_forward.5} parent=0 // loop_footer_branch
    %13 = sbr.rel target = $region3
  $region8: #{decoder_block_forward.5} parent=0 // loop_exit
    _

</llo_original>
